<compile_context>
chip_gen: v6e
topology: v6e:2x2x1
jax: 0.10.0
libtpu: 0.0.40
codegen_flags: <defaults>
</compile_context>

<pallas_src>
import jax
import jax.numpy as jnp
from jax.experimental import pallas as pl
from jax.experimental.pallas import tpu as pltpu

STATE_DIM = 400      # 4 x 100 entity embeddings
ACTION_DIM = 100     # one 100-d action embedding
HID = 100            # logical hidden width (as in the PyTorch model)
HID_PAD = 128        # hidden width padded to full vreg/MXU lanes

_TARGET_ROWS = 1024  # ~ (batch * action) rows per grid step


def _elu(x):
    # ELU(alpha=1) in f32. min() keeps exp() finite on the discarded positive branch.
    return jnp.where(x > 0, x, jnp.exp(jnp.minimum(x, 0.0)) - 1.0)


def _fused_net_kernel(state_ref, action_ref,
                      w1s_ref, w1a_ref, b1_ref, w2_ref, b2_ref, w3t_ref, b3_ref,
                      actor_ref, critic_ref):
    """Both heads of: (state, action) -> L1 -> ELU -> L2 -> ELU -> L3 -> sigmoid.

    state : (TB, 400)     bf16         action: (TB, A, 100) bf16
    weights stacked on a leading head axis (0 = actor, 1 = critic).
    outputs: (TB, A) f32 per head (lane-dense).
    """
    state = state_ref[...]                           # (TB, 400)
    action = action_ref[...]                         # (TB, A, 100)
    tb, a, _ = action.shape
    r = tb * a
    act2 = action.reshape(r, ACTION_DIM)             # merge leading dims (layout-free)

    def head(idx, out_ref):
        w1s = w1s_ref[idx]                           # (400, 128) bf16
        w1a = w1a_ref[idx]                           # (100, 128) bf16
        b1 = b1_ref[idx]                             # (1, 128)   f32
        w2 = w2_ref[idx]                             # (128, 128) bf16
        b2 = b2_ref[idx]                             # (1, 128)   f32
        w3t = w3t_ref[idx]                           # (1, 128)   f32 (W3 transposed)
        b3 = b3_ref[idx]                             # (1, 1)     f32

        # ---- layer 1: split matmul; state term computed once per batch row and
        # broadcast over that row's A candidate actions.
        s_h = jnp.dot(state, w1s, preferred_element_type=jnp.float32)    # (TB, 128)
        a_h = jnp.dot(act2, w1a, preferred_element_type=jnp.float32)     # (R, 128)
        h = a_h.reshape(tb, a, HID_PAD) + s_h[:, None, :] + b1           # (TB, A, 128)
        h = _elu(h).astype(jnp.bfloat16).reshape(r, HID_PAD)

        # ---- layer 2
        h = jnp.dot(h, w2, preferred_element_type=jnp.float32) + b2      # (R, 128)
        h = _elu(h).reshape(tb, a, HID_PAD)                              # keep f32

        # ---- layer 3 (output width 1) as elementwise mul + lane reduce -> (TB, A)
        z = jnp.sum(h * w3t, axis=-1) + b3                               # (TB, A)
        # sigmoid; reciprocal rides the EUP slot
        out_ref[...] = pl.reciprocal(1.0 + jnp.exp(-z), approx=True)

    head(0, actor_ref)
    head(1, critic_ref)


def _pick_tile_b(b, a):
    """Batch-rows per grid step: full B for small problems, else a multiple of 8."""
    if b * a <= 2 * _TARGET_ROWS:
        return b
    per = max(1, _TARGET_ROWS // max(a, 1))
    if per >= b:
        return b
    return max(8, (per // 8) * 8)


def _fused_heads(state2d, action3d, packed):
    """state2d: (B, 400) bf16, action3d: (B, A, 100) bf16 -> two (B, A) f32 arrays."""
    b, a, _ = action3d.shape
    tile_b = _pick_tile_b(b, a)
    grid = (pl.cdiv(b, tile_b),)

    w1s, w1a, b1, w2, b2, w3t, b3 = packed

    in_specs = [
        pl.BlockSpec((tile_b, STATE_DIM), lambda i: (i, 0)),
        pl.BlockSpec((tile_b, a, ACTION_DIM), lambda i: (i, 0, 0)),
        pl.BlockSpec((2, STATE_DIM, HID_PAD), lambda i: (0, 0, 0)),
        pl.BlockSpec((2, ACTION_DIM, HID_PAD), lambda i: (0, 0, 0)),
        pl.BlockSpec((2, 1, HID_PAD), lambda i: (0, 0, 0)),
        pl.BlockSpec((2, HID_PAD, HID_PAD), lambda i: (0, 0, 0)),
        pl.BlockSpec((2, 1, HID_PAD), lambda i: (0, 0, 0)),
        pl.BlockSpec((2, 1, HID_PAD), lambda i: (0, 0, 0)),
        pl.BlockSpec((2, 1, 1), lambda i: (0, 0, 0)),
    ]
    out_specs = (pl.BlockSpec((tile_b, a), lambda i: (i, 0)),
                 pl.BlockSpec((tile_b, a), lambda i: (i, 0)))
    out_shape = (jax.ShapeDtypeStruct((b, a), jnp.float32),
                 jax.ShapeDtypeStruct((b, a), jnp.float32))

    return pl.pallas_call(
        _fused_net_kernel,
        out_shape=out_shape,
        grid=grid,
        in_specs=in_specs,
        out_specs=out_specs,
        compiler_params=pltpu.CompilerParams(
            dimension_semantics=("parallel",)),
    )(state2d, action3d, w1s, w1a, b1, w2, b2, w3t, b3)


# ------------------------- parameters ---------------------------------------

def init_linear(key, fan_in, fan_out):
    """PyTorch nn.Linear default init: U(-1/sqrt(fan_in), 1/sqrt(fan_in)).
    Weight stored as (fan_in, fan_out) so the forward is x @ W + b."""
    kw, kb = jax.random.split(key)
    bound = 1.0 / jnp.sqrt(jnp.float32(fan_in))
    w = jax.random.uniform(kw, (fan_in, fan_out), jnp.float32, -bound, bound)
    b = jax.random.uniform(kb, (1, fan_out), jnp.float32, -bound, bound)
    return w, b


def init_net_params(key):
    keys = jax.random.split(key, 6)
    return {
        "actor_l1": init_linear(keys[0], STATE_DIM + ACTION_DIM, HID),
        "actor_l2": init_linear(keys[1], HID, HID),
        "actor_l3": init_linear(keys[2], HID, 1),
        "critic_l1": init_linear(keys[3], STATE_DIM + ACTION_DIM, HID),
        "critic_l2": init_linear(keys[4], HID, HID),
        "critic_l3": init_linear(keys[5], HID, 1),
    }


def prepare_params(params):
    """Split W1 into state/action halves, zero-pad hidden 100->128, transpose W3,
    stack actor/critic on a leading head axis, cast matmul weights to bf16."""
    def pad_last(x, n):
        return jnp.pad(x, [(0, 0)] * (x.ndim - 1) + [(0, n - x.shape[-1])])

    def pad_first(x, n):
        return jnp.pad(x, [(0, n - x.shape[0])] + [(0, 0)] * (x.ndim - 1))

    def head(prefix):
        w1, b1 = params[prefix + "_l1"]
        w2, b2 = params[prefix + "_l2"]
        w3, b3 = params[prefix + "_l3"]
        return (
            pad_last(w1[:STATE_DIM], HID_PAD),           # W1_state  (400, 128)
            pad_last(w1[STATE_DIM:], HID_PAD),           # W1_action (100, 128)
            pad_last(b1, HID_PAD),                       # b1        (1, 128)
            pad_last(pad_first(w2, HID_PAD), HID_PAD),   # W2        (128, 128)
            pad_last(b2, HID_PAD),                       # b2        (1, 128)
            pad_last(w3.T, HID_PAD),                     # W3^T      (1, 128)
            b3,                                          # b3        (1, 1)
        )

    actor, critic = head("actor"), head("critic")
    w1s, w1a, b1, w2, b2, w3t, b3 = (jnp.stack([x, y], axis=0)
                                     for x, y in zip(actor, critic))
    bf16 = lambda x: x.astype(jnp.bfloat16)
    # matmul operands in bf16; biases and the (elementwise) last-layer weight in f32
    return (bf16(w1s), bf16(w1a), b1, bf16(w2), b2, w3t, b3)


# ------------------------- forward ------------------------------------------

def net_forward(packed_params, state_input, action_input):
    """Mirrors Net.forward. Returns (act_probs, q_actions), each lead_shape + (1,)."""
    if state_input.ndim < action_input.ndim:
        if action_input.ndim == 3:
            # (B, 400) state shared across A candidate actions: the broadcast is
            # implicit inside the kernel (state is never expanded/concatenated).
            lead_shape = action_input.shape[:-1]
            s2 = state_input
            a3 = action_input
        else:
            # TODO(synk): 4-D action_input branch (2-D state expanded twice) not implemented.
            raise NotImplementedError("4-D action_input branch not implemented")
    elif state_input.ndim == 2:
        # equal rank: one action per state row
        lead_shape = (state_input.shape[0],)
        s2 = state_input
        a3 = action_input[:, None, :]
    else:
        # equal rank >= 3: per-row state, flatten leading dims (no state dedup possible)
        lead_shape = state_input.shape[:-1]
        s2 = state_input.reshape(-1, STATE_DIM)
        a3 = action_input.reshape(-1, 1, ACTION_DIM)

    s2 = s2.astype(jnp.bfloat16)
    a3 = a3.astype(jnp.bfloat16)
    act, q = _fused_heads(s2, a3, packed_params)
    return act.reshape(lead_shape + (1,)), q.reshape(lead_shape + (1,))


def _reference_forward(params, state_input, action_input):
    """Pure-JAX f32 reference (materialized broadcast + concat) for checking."""
    s = jnp.broadcast_to(
        state_input[:, None, :],
        (state_input.shape[0], action_input.shape[1], state_input.shape[-1]))
    x = jnp.concatenate([s, action_input], axis=-1)

    def mlp_head(x, w1, b1, w2, b2, w3, b3):
        h = x @ w1 + b1
        h = jnp.where(h > 0, h, jnp.exp(jnp.minimum(h, 0.0)) - 1.0)
        h = h @ w2 + b2
        h = jnp.where(h > 0, h, jnp.exp(jnp.minimum(h, 0.0)) - 1.0)
        return jax.nn.sigmoid(h @ w3 + b3)

    a = mlp_head(x, *params["actor_l1"], *params["actor_l2"], *params["actor_l3"])
    c = mlp_head(x, *params["critic_l1"], *params["critic_l2"], *params["critic_l3"])
    return a, c


if __name__ == "__main__":
    key = jax.random.PRNGKey(0)
    k_params, k_state, k_action = jax.random.split(key, 3)

    B, A = 2, 8   # small demo shapes: 2 batch rows, 8 candidate actions each
    params = init_net_params(k_params)
    packed = prepare_params(params)
    state_input = jax.random.normal(k_state, (B, STATE_DIM), jnp.float32)
    action_input = jax.random.normal(k_action, (B, A, ACTION_DIM), jnp.float32)

    act_probs, q_actions = net_forward(packed, state_input, action_input)
    act_probs = jax.block_until_ready(act_probs)
    q_actions = jax.block_until_ready(q_actions)

    ref_a, ref_q = _reference_forward(params, state_input, action_input)
    assert act_probs.shape == (B, A, 1) and q_actions.shape == (B, A, 1)
    # bf16 activations/weights -> loosened tolerance vs the f32 reference
    assert jnp.allclose(act_probs, ref_a, atol=5e-2), float(jnp.max(jnp.abs(act_probs - ref_a)))
    assert jnp.allclose(q_actions, ref_q, atol=5e-2), float(jnp.max(jnp.abs(q_actions - ref_q)))

    print("KERNEL_OK")
</pallas_src>

<mosaic_0001>
module attributes {stable_mosaic.version = 11 : i64} {
  func.func @_fused_net_kernel(%arg0: i32, %arg1: memref<2x400xbf16, #tpu.memory_space<vmem>>, %arg2: memref<2x8x100xbf16, #tpu.memory_space<vmem>>, %arg3: memref<2x400x128xbf16, #tpu.memory_space<vmem>>, %arg4: memref<2x100x128xbf16, #tpu.memory_space<vmem>>, %arg5: memref<2x1x128xf32, #tpu.memory_space<vmem>>, %arg6: memref<2x128x128xbf16, #tpu.memory_space<vmem>>, %arg7: memref<2x1x128xf32, #tpu.memory_space<vmem>>, %arg8: memref<2x1x128xf32, #tpu.memory_space<vmem>>, %arg9: memref<2x1x1xf32, #tpu.memory_space<vmem>>, %arg10: memref<2x8xf32, #tpu.memory_space<vmem>>, %arg11: memref<2x8xf32, #tpu.memory_space<vmem>>) attributes {dimension_semantics = [#tpu.dimension_semantics<parallel>], iteration_bounds = array<i64: 1>, scalar_prefetch = 0 : i64, scratch_operands = 0 : i64, tpu.core_type = #tpu.core_type<tc>, window_params = [{transform_indices = @transform_0, window_bounds = array<i64: 2, 400>}, {transform_indices = @transform_1, window_bounds = array<i64: 2, 8, 100>}, {pipeline_mode = #tpu.pipeline_mode<synchronous>, transform_indices = @transform_2, window_bounds = array<i64: 2, 400, 128>}, {pipeline_mode = #tpu.pipeline_mode<synchronous>, transform_indices = @transform_3, window_bounds = array<i64: 2, 100, 128>}, {pipeline_mode = #tpu.pipeline_mode<synchronous>, transform_indices = @transform_4, window_bounds = array<i64: 2, 1, 128>}, {pipeline_mode = #tpu.pipeline_mode<synchronous>, transform_indices = @transform_5, window_bounds = array<i64: 2, 128, 128>}, {pipeline_mode = #tpu.pipeline_mode<synchronous>, transform_indices = @transform_6, window_bounds = array<i64: 2, 1, 128>}, {pipeline_mode = #tpu.pipeline_mode<synchronous>, transform_indices = @transform_7, window_bounds = array<i64: 2, 1, 128>}, {pipeline_mode = #tpu.pipeline_mode<synchronous>, transform_indices = @transform_8, window_bounds = array<i64: 2, 1, 1>}, {transform_indices = @transform_9, window_bounds = array<i64: 2, 8>}, {transform_indices = @transform_10, window_bounds = array<i64: 2, 8>}]} {
    %c0 = arith.constant 0 : index
    %c0_0 = arith.constant 0 : index
    %0 = vector.load %arg1[%c0, %c0_0] : memref<2x400xbf16, #tpu.memory_space<vmem>>, vector<2x400xbf16>
    %c0_1 = arith.constant 0 : index
    %c0_2 = arith.constant 0 : index
    %c0_3 = arith.constant 0 : index
    %1 = vector.load %arg2[%c0_1, %c0_2, %c0_3] : memref<2x8x100xbf16, #tpu.memory_space<vmem>>, vector<2x8x100xbf16>
    %2 = vector.shape_cast %1 : vector<2x8x100xbf16> to vector<16x100xbf16>
    %c0_4 = arith.constant 0 : index
    %c0_5 = arith.constant 0 : index
    %c0_6 = arith.constant 0 : index
    %3 = vector.load %arg3[%c0_4, %c0_5, %c0_6] : memref<2x400x128xbf16, #tpu.memory_space<vmem>>, vector<1x400x128xbf16>
    %4 = vector.shape_cast %3 : vector<1x400x128xbf16> to vector<400x128xbf16>
    %c0_7 = arith.constant 0 : index
    %c0_8 = arith.constant 0 : index
    %c0_9 = arith.constant 0 : index
    %5 = vector.load %arg4[%c0_7, %c0_8, %c0_9] : memref<2x100x128xbf16, #tpu.memory_space<vmem>>, vector<1x100x128xbf16>
    %6 = vector.shape_cast %5 : vector<1x100x128xbf16> to vector<100x128xbf16>
    %c0_10 = arith.constant 0 : index
    %c0_11 = arith.constant 0 : index
    %c0_12 = arith.constant 0 : index
    %7 = vector.load %arg5[%c0_10, %c0_11, %c0_12] : memref<2x1x128xf32, #tpu.memory_space<vmem>>, vector<1x1x128xf32>
    %8 = vector.shape_cast %7 : vector<1x1x128xf32> to vector<1x128xf32>
    %c0_13 = arith.constant 0 : index
    %c0_14 = arith.constant 0 : index
    %c0_15 = arith.constant 0 : index
    %9 = vector.load %arg6[%c0_13, %c0_14, %c0_15] : memref<2x128x128xbf16, #tpu.memory_space<vmem>>, vector<1x128x128xbf16>
    %10 = vector.shape_cast %9 : vector<1x128x128xbf16> to vector<128x128xbf16>
    %c0_16 = arith.constant 0 : index
    %c0_17 = arith.constant 0 : index
    %c0_18 = arith.constant 0 : index
    %11 = vector.load %arg7[%c0_16, %c0_17, %c0_18] : memref<2x1x128xf32, #tpu.memory_space<vmem>>, vector<1x1x128xf32>
    %12 = vector.shape_cast %11 : vector<1x1x128xf32> to vector<1x128xf32>
    %c0_19 = arith.constant 0 : index
    %c0_20 = arith.constant 0 : index
    %c0_21 = arith.constant 0 : index
    %13 = vector.load %arg8[%c0_19, %c0_20, %c0_21] : memref<2x1x128xf32, #tpu.memory_space<vmem>>, vector<1x1x128xf32>
    %14 = vector.shape_cast %13 : vector<1x1x128xf32> to vector<1x128xf32>
    %c0_22 = arith.constant 0 : index
    %c0_23 = arith.constant 0 : index
    %c0_24 = arith.constant 0 : index
    %15 = vector.load %arg9[%c0_22, %c0_23, %c0_24] : memref<2x1x1xf32, #tpu.memory_space<vmem>>, vector<1x1x1xf32>
    %16 = vector.shape_cast %15 : vector<1x1x1xf32> to vector<1x1xf32>
    %cst = arith.constant dense<0.000000e+00> : vector<2x128xf32>
    %17 = tpu.matmul %0, %4, %cst {dimension_numbers = #tpu.dot_dimension_numbers<[1], [0], [0], [1], [0, 0, 1, 1], [], []>} : vector<2x400xbf16>, vector<400x128xbf16>, vector<2x128xf32> -> vector<2x128xf32>
    %cst_25 = arith.constant dense<0.000000e+00> : vector<16x128xf32>
    %18 = tpu.matmul %2, %6, %cst_25 {dimension_numbers = #tpu.dot_dimension_numbers<[1], [0], [0], [1], [0, 0, 1, 1], [], []>} : vector<16x100xbf16>, vector<100x128xbf16>, vector<16x128xf32> -> vector<16x128xf32>
    %19 = vector.shape_cast %18 : vector<16x128xf32> to vector<2x8x128xf32>
    %20 = vector.shape_cast %17 : vector<2x128xf32> to vector<2x1x128xf32>
    %21 = vector.broadcast %20 : vector<2x1x128xf32> to vector<2x8x128xf32>
    %22 = arith.addf %19, %21 : vector<2x8x128xf32>
    %23 = vector.shape_cast %8 : vector<1x128xf32> to vector<1x1x128xf32>
    %24 = vector.broadcast %23 : vector<1x1x128xf32> to vector<2x8x128xf32>
    %25 = arith.addf %22, %24 : vector<2x8x128xf32>
    %cst_26 = arith.constant 0.000000e+00 : f32
    %26 = vector.broadcast %cst_26 : f32 to vector<2x8x128xf32>
    %27 = arith.cmpf ogt, %25, %26 : vector<2x8x128xf32>
    %cst_27 = arith.constant 0.000000e+00 : f32
    %28 = vector.broadcast %cst_27 : f32 to vector<2x8x128xf32>
    %29 = arith.minimumf %25, %28 : vector<2x8x128xf32>
    %30 = math.exp %29 : vector<2x8x128xf32>
    %cst_28 = arith.constant 1.000000e+00 : f32
    %31 = vector.broadcast %cst_28 : f32 to vector<2x8x128xf32>
    %32 = arith.subf %30, %31 : vector<2x8x128xf32>
    %33 = arith.select %27, %25, %32 : vector<2x8x128xi1>, vector<2x8x128xf32>
    %34 = arith.truncf %33 : vector<2x8x128xf32> to vector<2x8x128xbf16>
    %35 = vector.shape_cast %34 : vector<2x8x128xbf16> to vector<16x128xbf16>
    %cst_29 = arith.constant dense<0.000000e+00> : vector<16x128xf32>
    %36 = tpu.matmul %35, %10, %cst_29 {dimension_numbers = #tpu.dot_dimension_numbers<[1], [0], [0], [1], [0, 0, 1, 1], [], []>} : vector<16x128xbf16>, vector<128x128xbf16>, vector<16x128xf32> -> vector<16x128xf32>
    %37 = vector.broadcast %12 : vector<1x128xf32> to vector<16x128xf32>
    %38 = arith.addf %36, %37 : vector<16x128xf32>
    %cst_30 = arith.constant 0.000000e+00 : f32
    %39 = vector.broadcast %cst_30 : f32 to vector<16x128xf32>
    %40 = arith.cmpf ogt, %38, %39 : vector<16x128xf32>
    %cst_31 = arith.constant 0.000000e+00 : f32
    %41 = vector.broadcast %cst_31 : f32 to vector<16x128xf32>
    %42 = arith.minimumf %38, %41 : vector<16x128xf32>
    %43 = math.exp %42 : vector<16x128xf32>
    %cst_32 = arith.constant 1.000000e+00 : f32
    %44 = vector.broadcast %cst_32 : f32 to vector<16x128xf32>
    %45 = arith.subf %43, %44 : vector<16x128xf32>
    %46 = arith.select %40, %38, %45 : vector<16x128xi1>, vector<16x128xf32>
    %47 = vector.shape_cast %46 : vector<16x128xf32> to vector<2x8x128xf32>
    %48 = vector.shape_cast %14 : vector<1x128xf32> to vector<1x1x128xf32>
    %49 = vector.broadcast %48 : vector<1x1x128xf32> to vector<2x8x128xf32>
    %50 = arith.mulf %47, %49 : vector<2x8x128xf32>
    %cst_33 = arith.constant dense<0.000000e+00> : vector<2x8xf32>
    %51 = vector.multi_reduction <add>, %50, %cst_33 [2] : vector<2x8x128xf32> to vector<2x8xf32>
    %52 = vector.broadcast %16 : vector<1x1xf32> to vector<2x8xf32>
    %53 = arith.addf %51, %52 : vector<2x8xf32>
    %cst_34 = arith.constant 0.000000e+00 : f32
    %54 = vector.broadcast %cst_34 : f32 to vector<2x8xf32>
    %55 = arith.subf %54, %53 : vector<2x8xf32>
    %56 = math.exp %55 : vector<2x8xf32>
    %cst_35 = arith.constant 1.000000e+00 : f32
    %57 = vector.broadcast %cst_35 : f32 to vector<2x8xf32>
    %58 = arith.addf %57, %56 : vector<2x8xf32>
    %59 = tpu.reciprocal %58 {approx = true} : vector<2x8xf32> -> vector<2x8xf32>
    %c0_36 = arith.constant 0 : index
    %c0_37 = arith.constant 0 : index
    %60 = vector.load %arg10[%c0_36, %c0_37] : memref<2x8xf32, #tpu.memory_space<vmem>>, vector<2x8xf32>
    tpu.vector_store %arg10[%c0_36, %c0_37], %59 {strides = array<i32>} : memref<2x8xf32, #tpu.memory_space<vmem>>, vector<2x8xf32>,
    %c1 = arith.constant 1 : index
    %c0_38 = arith.constant 0 : index
    %c0_39 = arith.constant 0 : index
    %61 = vector.load %arg3[%c1, %c0_38, %c0_39] : memref<2x400x128xbf16, #tpu.memory_space<vmem>>, vector<1x400x128xbf16>
    %62 = vector.shape_cast %61 : vector<1x400x128xbf16> to vector<400x128xbf16>
    %c1_40 = arith.constant 1 : index
    %c0_41 = arith.constant 0 : index
    %c0_42 = arith.constant 0 : index
    %63 = vector.load %arg4[%c1_40, %c0_41, %c0_42] : memref<2x100x128xbf16, #tpu.memory_space<vmem>>, vector<1x100x128xbf16>
    %64 = vector.shape_cast %63 : vector<1x100x128xbf16> to vector<100x128xbf16>
    %c1_43 = arith.constant 1 : index
    %c0_44 = arith.constant 0 : index
    %c0_45 = arith.constant 0 : index
    %65 = vector.load %arg5[%c1_43, %c0_44, %c0_45] : memref<2x1x128xf32, #tpu.memory_space<vmem>>, vector<1x1x128xf32>
    %66 = vector.shape_cast %65 : vector<1x1x128xf32> to vector<1x128xf32>
    %c1_46 = arith.constant 1 : index
    %c0_47 = arith.constant 0 : index
    %c0_48 = arith.constant 0 : index
    %67 = vector.load %arg6[%c1_46, %c0_47, %c0_48] : memref<2x128x128xbf16, #tpu.memory_space<vmem>>, vector<1x128x128xbf16>
    %68 = vector.shape_cast %67 : vector<1x128x128xbf16> to vector<128x128xbf16>
    %c1_49 = arith.constant 1 : index
    %c0_50 = arith.constant 0 : index
    %c0_51 = arith.constant 0 : index
    %69 = vector.load %arg7[%c1_49, %c0_50, %c0_51] : memref<2x1x128xf32, #tpu.memory_space<vmem>>, vector<1x1x128xf32>
    %70 = vector.shape_cast %69 : vector<1x1x128xf32> to vector<1x128xf32>
    %c1_52 = arith.constant 1 : index
    %c0_53 = arith.constant 0 : index
    %c0_54 = arith.constant 0 : index
    %71 = vector.load %arg8[%c1_52, %c0_53, %c0_54] : memref<2x1x128xf32, #tpu.memory_space<vmem>>, vector<1x1x128xf32>
    %72 = vector.shape_cast %71 : vector<1x1x128xf32> to vector<1x128xf32>
    %c1_55 = arith.constant 1 : index
    %c0_56 = arith.constant 0 : index
    %c0_57 = arith.constant 0 : index
    %73 = vector.load %arg9[%c1_55, %c0_56, %c0_57] : memref<2x1x1xf32, #tpu.memory_space<vmem>>, vector<1x1x1xf32>
    %74 = vector.shape_cast %73 : vector<1x1x1xf32> to vector<1x1xf32>
    %cst_58 = arith.constant dense<0.000000e+00> : vector<2x128xf32>
    %75 = tpu.matmul %0, %62, %cst_58 {dimension_numbers = #tpu.dot_dimension_numbers<[1], [0], [0], [1], [0, 0, 1, 1], [], []>} : vector<2x400xbf16>, vector<400x128xbf16>, vector<2x128xf32> -> vector<2x128xf32>
    %cst_59 = arith.constant dense<0.000000e+00> : vector<16x128xf32>
    %76 = tpu.matmul %2, %64, %cst_59 {dimension_numbers = #tpu.dot_dimension_numbers<[1], [0], [0], [1], [0, 0, 1, 1], [], []>} : vector<16x100xbf16>, vector<100x128xbf16>, vector<16x128xf32> -> vector<16x128xf32>
    %77 = vector.shape_cast %76 : vector<16x128xf32> to vector<2x8x128xf32>
    %78 = vector.shape_cast %75 : vector<2x128xf32> to vector<2x1x128xf32>
    %79 = vector.broadcast %78 : vector<2x1x128xf32> to vector<2x8x128xf32>
    %80 = arith.addf %77, %79 : vector<2x8x128xf32>
    %81 = vector.shape_cast %66 : vector<1x128xf32> to vector<1x1x128xf32>
    %82 = vector.broadcast %81 : vector<1x1x128xf32> to vector<2x8x128xf32>
    %83 = arith.addf %80, %82 : vector<2x8x128xf32>
    %cst_60 = arith.constant 0.000000e+00 : f32
    %84 = vector.broadcast %cst_60 : f32 to vector<2x8x128xf32>
    %85 = arith.cmpf ogt, %83, %84 : vector<2x8x128xf32>
    %cst_61 = arith.constant 0.000000e+00 : f32
    %86 = vector.broadcast %cst_61 : f32 to vector<2x8x128xf32>
    %87 = arith.minimumf %83, %86 : vector<2x8x128xf32>
    %88 = math.exp %87 : vector<2x8x128xf32>
    %cst_62 = arith.constant 1.000000e+00 : f32
    %89 = vector.broadcast %cst_62 : f32 to vector<2x8x128xf32>
    %90 = arith.subf %88, %89 : vector<2x8x128xf32>
    %91 = arith.select %85, %83, %90 : vector<2x8x128xi1>, vector<2x8x128xf32>
    %92 = arith.truncf %91 : vector<2x8x128xf32> to vector<2x8x128xbf16>
    %93 = vector.shape_cast %92 : vector<2x8x128xbf16> to vector<16x128xbf16>
    %cst_63 = arith.constant dense<0.000000e+00> : vector<16x128xf32>
    %94 = tpu.matmul %93, %68, %cst_63 {dimension_numbers = #tpu.dot_dimension_numbers<[1], [0], [0], [1], [0, 0, 1, 1], [], []>} : vector<16x128xbf16>, vector<128x128xbf16>, vector<16x128xf32> -> vector<16x128xf32>
    %95 = vector.broadcast %70 : vector<1x128xf32> to vector<16x128xf32>
    %96 = arith.addf %94, %95 : vector<16x128xf32>
    %cst_64 = arith.constant 0.000000e+00 : f32
    %97 = vector.broadcast %cst_64 : f32 to vector<16x128xf32>
    %98 = arith.cmpf ogt, %96, %97 : vector<16x128xf32>
    %cst_65 = arith.constant 0.000000e+00 : f32
    %99 = vector.broadcast %cst_65 : f32 to vector<16x128xf32>
    %100 = arith.minimumf %96, %99 : vector<16x128xf32>
    %101 = math.exp %100 : vector<16x128xf32>
    %cst_66 = arith.constant 1.000000e+00 : f32
    %102 = vector.broadcast %cst_66 : f32 to vector<16x128xf32>
    %103 = arith.subf %101, %102 : vector<16x128xf32>
    %104 = arith.select %98, %96, %103 : vector<16x128xi1>, vector<16x128xf32>
    %105 = vector.shape_cast %104 : vector<16x128xf32> to vector<2x8x128xf32>
    %106 = vector.shape_cast %72 : vector<1x128xf32> to vector<1x1x128xf32>
    %107 = vector.broadcast %106 : vector<1x1x128xf32> to vector<2x8x128xf32>
    %108 = arith.mulf %105, %107 : vector<2x8x128xf32>
    %cst_67 = arith.constant dense<0.000000e+00> : vector<2x8xf32>
    %109 = vector.multi_reduction <add>, %108, %cst_67 [2] : vector<2x8x128xf32> to vector<2x8xf32>
    %110 = vector.broadcast %74 : vector<1x1xf32> to vector<2x8xf32>
    %111 = arith.addf %109, %110 : vector<2x8xf32>
    %cst_68 = arith.constant 0.000000e+00 : f32
    %112 = vector.broadcast %cst_68 : f32 to vector<2x8xf32>
    %113 = arith.subf %112, %111 : vector<2x8xf32>
    %114 = math.exp %113 : vector<2x8xf32>
    %cst_69 = arith.constant 1.000000e+00 : f32
    %115 = vector.broadcast %cst_69 : f32 to vector<2x8xf32>
    %116 = arith.addf %115, %114 : vector<2x8xf32>
    %117 = tpu.reciprocal %116 {approx = true} : vector<2x8xf32> -> vector<2x8xf32>
    %c0_70 = arith.constant 0 : index
    %c0_71 = arith.constant 0 : index
    %118 = vector.load %arg11[%c0_70, %c0_71] : memref<2x8xf32, #tpu.memory_space<vmem>>, vector<2x8xf32>
    tpu.vector_store %arg11[%c0_70, %c0_71], %117 {strides = array<i32>} : memref<2x8xf32, #tpu.memory_space<vmem>>, vector<2x8xf32>,
    return
  }
  func.func @transform_0(%arg0: i32) -> (i32, i32) {
    %c0_i32 = arith.constant 0 : i32
    %c0_i32_0 = arith.constant 0 : i32
    return %arg0, %c0_i32 : i32, i32
  }
  func.func @transform_1(%arg0: i32) -> (i32, i32, i32) {
    %c0_i32 = arith.constant 0 : i32
    %c0_i32_0 = arith.constant 0 : i32
    %c0_i32_1 = arith.constant 0 : i32
    return %arg0, %c0_i32, %c0_i32_0 : i32, i32, i32
  }
  func.func @transform_2(%arg0: i32) -> (i32, i32, i32) {
    %c0_i32 = arith.constant 0 : i32
    %c0_i32_0 = arith.constant 0 : i32
    %c0_i32_1 = arith.constant 0 : i32
    %c0_i32_2 = arith.constant 0 : i32
    return %c0_i32, %c0_i32_0, %c0_i32_1 : i32, i32, i32
  }
  func.func @transform_3(%arg0: i32) -> (i32, i32, i32) {
    %c0_i32 = arith.constant 0 : i32
    %c0_i32_0 = arith.constant 0 : i32
    %c0_i32_1 = arith.constant 0 : i32
    %c0_i32_2 = arith.constant 0 : i32
    return %c0_i32, %c0_i32_0, %c0_i32_1 : i32, i32, i32
  }
  func.func @transform_4(%arg0: i32) -> (i32, i32, i32) {
    %c0_i32 = arith.constant 0 : i32
    %c0_i32_0 = arith.constant 0 : i32
    %c0_i32_1 = arith.constant 0 : i32
    %c0_i32_2 = arith.constant 0 : i32
    return %c0_i32, %c0_i32_0, %c0_i32_1 : i32, i32, i32
  }
  func.func @transform_5(%arg0: i32) -> (i32, i32, i32) {
    %c0_i32 = arith.constant 0 : i32
    %c0_i32_0 = arith.constant 0 : i32
    %c0_i32_1 = arith.constant 0 : i32
    %c0_i32_2 = arith.constant 0 : i32
    return %c0_i32, %c0_i32_0, %c0_i32_1 : i32, i32, i32
  }
  func.func @transform_6(%arg0: i32) -> (i32, i32, i32) {
    %c0_i32 = arith.constant 0 : i32
    %c0_i32_0 = arith.constant 0 : i32
    %c0_i32_1 = arith.constant 0 : i32
    %c0_i32_2 = arith.constant 0 : i32
    return %c0_i32, %c0_i32_0, %c0_i32_1 : i32, i32, i32
  }
  func.func @transform_7(%arg0: i32) -> (i32, i32, i32) {
    %c0_i32 = arith.constant 0 : i32
    %c0_i32_0 = arith.constant 0 : i32
    %c0_i32_1 = arith.constant 0 : i32
    %c0_i32_2 = arith.constant 0 : i32
    return %c0_i32, %c0_i32_0, %c0_i32_1 : i32, i32, i32
  }
  func.func @transform_8(%arg0: i32) -> (i32, i32, i32) {
    %c0_i32 = arith.constant 0 : i32
    %c0_i32_0 = arith.constant 0 : i32
    %c0_i32_1 = arith.constant 0 : i32
    %c0_i32_2 = arith.constant 0 : i32
    return %c0_i32, %c0_i32_0, %c0_i32_1 : i32, i32, i32
  }
  func.func @transform_9(%arg0: i32) -> (i32, i32) {
    %c0_i32 = arith.constant 0 : i32
    %c0_i32_0 = arith.constant 0 : i32
    return %arg0, %c0_i32 : i32, i32
  }
  func.func @transform_10(%arg0: i32) -> (i32, i32) {
    %c0_i32 = arith.constant 0 : i32
    %c0_i32_0 = arith.constant 0 : i32
    return %arg0, %c0_i32 : i32, i32
  }
}

</mosaic_0001>

<llo_original>
// kernel: tpu_custom_call.1
$region0: #{tpu_custom_call.1}
  #allocation0 [shape = 'u32[]', space=smem, size = 0x4, offset = 0x4, fixed_abs, tag = 'smem constant byte address 0x4 - core index']
  #allocation1 [shape = 'u32[144,128]{1,0:T(1,128)}', space=vmem, size = 0x12000, scoped, tag = 'internal scratch']
  %s0 = inlined_call_operand.vmem [shape: bf16[2,400], index: 0, kind: input, shape index: {}]
  %s1 = inlined_call_operand.vmem [shape: bf16[2,8,100], index: 1, kind: input, shape index: {}]
  %s2 = inlined_call_operand.hbm [shape: bf16[2,400,128], index: 2, kind: input, shape index: {}]
  %s3 = inlined_call_operand.vmem [shape: bf16[2,100,128], index: 3, kind: input, shape index: {}]
  %s4 = inlined_call_operand.vmem [shape: f32[2,1,128], index: 4, kind: input, shape index: {}]
  %s5 = inlined_call_operand.vmem [shape: bf16[2,128,128], index: 5, kind: input, shape index: {}]
  %s6 = inlined_call_operand.vmem [shape: f32[2,1,128], index: 6, kind: input, shape index: {}]
  %s7 = inlined_call_operand.vmem [shape: f32[2,1,128], index: 7, kind: input, shape index: {}]
  %s8 = inlined_call_operand.vmem [shape: f32[2,1,1], index: 8, kind: input, shape index: {}]
  %s9 = inlined_call_operand.hbm [shape: f32[2,8], index: 9, kind: output, shape index: {0}]
  %s10 = inlined_call_operand.hbm [shape: f32[2,8], index: 10, kind: output, shape index: {1}]
  %11 = xla_tuple %s9, %s10
  %s12 = sld [smem:[#allocation0]]
  $region58: #{tpu_custom_call.1} parent=0
    _
  %s14 = ssub.s32 1, %s12
  %s15 = scalar_select 0, %s14, %s12
  $region1: #{tpu_custom_call.1} parent=0
    #allocation2 [shape = 'u8[204800]{0}', space=vmem, size = 0x32000, scoped, tag = 'input window, operand 2, single buffered']
    #allocation3 [shape = 's32[1]{0}', space=sflag, size = 0x4, scoped, tag = 'scoped memory for tpu_custom_call.1']
    #allocation4 [shape = 's32[1]{0}', space=sflag, size = 0x4, scoped, tag = 'scoped memory for tpu_custom_call.1']
    #allocation5 [shape = 'u8[1024]{0}', space=vmem, size = 0x400, scoped, tag = 'output window, operand 0, single buffered']
    #allocation6 [shape = 'u8[1024]{0}', space=vmem, size = 0x400, scoped, tag = 'output window, operand 1, single buffered']
    #allocation7 [shape = 's32[1]{0}', space=sflag, size = 0x4, scoped, tag = 'scoped memory for tpu_custom_call.1']
    %16 = vsyncpa [#allocation3], 0
    %17 = vsyncpa [#allocation4], 0
    %18 = vsyncpa [#allocation7], 0
    // Predicated region
    $region2: #{tpu_custom_call.1} parent=1 // pred_check
      _
    $region3: #{tpu_custom_call.1} parent=1 // pred_check_branch
      %20 = sbr.rel (0) target = $region5
    $region4: #{tpu_custom_call.1} parent=1 // pred_region
      _
    $region5: #{tpu_custom_call.1} parent=1 // pred_fallthru
      _
    // Predicated region
    $region6: #{tpu_custom_call.1} parent=1 // pred_check
      _
    $region7: #{tpu_custom_call.1} parent=1 // pred_check_branch
      %22 = sbr.rel (0) target = $region9
    $region8: #{tpu_custom_call.1} parent=1 // pred_region
      _
    $region9: #{tpu_custom_call.1} parent=1 // pred_fallthru
      _
    // Predicated region
    $region10: #{tpu_custom_call.1} parent=1 // pred_check
      _
    $region11: #{tpu_custom_call.1} parent=1 // pred_check_branch
      %24 = sbr.rel (0) target = $region13
    $region12: #{tpu_custom_call.1} parent=1 // pred_region
      %s26 = ssub.s32 6400, 6400
      %27 = vsyncadd [#allocation3], %s26
      %s28 = sshll.u32 [#allocation2], 4
      %s29 = int_to_ptr.vmem [resolvable:$true] %s28
      %34 = dma.hbm_to_vmem [thread:$0]  %s2, 6400, %s29, [#allocation3], 64, 64, 4
    $region13: #{tpu_custom_call.1} parent=1 // pred_fallthru
      _
    // Predicated region
    $region14: #{tpu_custom_call.1} parent=1 // pred_check
      _
    $region15: #{tpu_custom_call.1} parent=1 // pred_check_branch
      %36 = sbr.rel (0) target = $region17
    $region16: #{tpu_custom_call.1} parent=1 // pred_region
      _
    $region17: #{tpu_custom_call.1} parent=1 // pred_fallthru
      _
    // Predicated region
    $region18: #{tpu_custom_call.1} parent=1 // pred_check
      _
    $region19: #{tpu_custom_call.1} parent=1 // pred_check_branch
      %38 = sbr.rel (0) target = $region21
    $region20: #{tpu_custom_call.1} parent=1 // pred_region
      _
    $region21: #{tpu_custom_call.1} parent=1 // pred_fallthru
      _
    // Predicated region
    $region22: #{tpu_custom_call.1} parent=1 // pred_check
      _
    $region23: #{tpu_custom_call.1} parent=1 // pred_check_branch
      %40 = sbr.rel (0) target = $region25
    $region24: #{tpu_custom_call.1} parent=1 // pred_region
      _
    $region25: #{tpu_custom_call.1} parent=1 // pred_fallthru
      _
    // Predicated region
    $region26: #{tpu_custom_call.1} parent=1 // pred_check
      _
    $region27: #{tpu_custom_call.1} parent=1 // pred_check_branch
      %42 = sbr.rel (0) target = $region29
    $region28: #{tpu_custom_call.1} parent=1 // pred_region
      _
    $region29: #{tpu_custom_call.1} parent=1 // pred_fallthru
      _
    // Predicated region
    $region30: #{tpu_custom_call.1} parent=1 // pred_check
      _
    $region31: #{tpu_custom_call.1} parent=1 // pred_check_branch
      %44 = sbr.rel (0) target = $region33
    $region32: #{tpu_custom_call.1} parent=1 // pred_region
      _
    $region33: #{tpu_custom_call.1} parent=1 // pred_fallthru
      _
    // Predicated region
    $region34: #{tpu_custom_call.1} parent=1 // pred_check
      _
    $region35: #{tpu_custom_call.1} parent=1 // pred_check_branch
      %46 = sbr.rel (0) target = $region37
    $region36: #{tpu_custom_call.1} parent=1 // pred_region
      _
    $region37: #{tpu_custom_call.1} parent=1 // pred_fallthru
      _
    // Predicated region
    $region38: #{tpu_custom_call.1} parent=1 // pred_check
      _
    $region39: #{tpu_custom_call.1} parent=1 // pred_check_branch
      %48 = sbr.rel (0) target = $region41
    $region40: #{tpu_custom_call.1} parent=1 // pred_region
      %49 = dma.done [#allocation3], 6400
    $region41: #{tpu_custom_call.1} parent=1 // pred_fallthru
      _
    %v51 = vld [vmem:[%s0] sm:$0xf]
    %v52 = vld [vmem:[%s1] sm:$0xf]
    %v53 = vld [vmem:[%s1 + $0x4] sm:$0xf]
    %v54 = vld [vmem:[#allocation2] sm:$0xf]
    %v55 = vld [vmem:[#allocation2 + $0x4] sm:$0xf]
    %v56 = vld [vmem:[#allocation2 + $0x8] sm:$0xf]
    %v57 = vld [vmem:[#allocation2 + $0xc] sm:$0xf]
    %v58 = vld [vmem:[#allocation2 + $0x10] sm:$0xf]
    %v59 = vld [vmem:[#allocation2 + $0x14] sm:$0xf]
    %v60 = vld [vmem:[#allocation2 + $0x18] sm:$0xf]
    %v61 = vld [vmem:[#allocation2 + $0x1c] sm:$0xf]
    %v62 = vld [vmem:[#allocation2 + $0x20] sm:$0xf]
    %v63 = vld [vmem:[#allocation2 + $0x24] sm:$0xf]
    %v64 = vld [vmem:[#allocation2 + $0x28] sm:$0xf]
    %v65 = vld [vmem:[#allocation2 + $0x2c] sm:$0xf]
    %v66 = vld [vmem:[#allocation2 + $0x30] sm:$0xf]
    %v67 = vld [vmem:[#allocation2 + $0x34] sm:$0xf]
    %v68 = vld [vmem:[#allocation2 + $0x38] sm:$0xf]
    %v69 = vld [vmem:[#allocation2 + $0x3c] sm:$0xf]
    %v70 = vld [vmem:[#allocation2 + $0x40] sm:$0xf]
    %v71 = vld [vmem:[#allocation2 + $0x44] sm:$0xf]
    %v72 = vld [vmem:[#allocation2 + $0x48] sm:$0xf]
    %v73 = vld [vmem:[#allocation2 + $0x4c] sm:$0xf]
    %v74 = vld [vmem:[#allocation2 + $0x50] sm:$0xf]
    %v75 = vld [vmem:[#allocation2 + $0x54] sm:$0xf]
    %v76 = vld [vmem:[#allocation2 + $0x58] sm:$0xf]
    %v77 = vld [vmem:[#allocation2 + $0x5c] sm:$0xf]
    %v78 = vld [vmem:[#allocation2 + $0x60] sm:$0xf]
    %v79 = vld [vmem:[#allocation2 + $0x64] sm:$0xf]
    %v80 = vld [vmem:[#allocation2 + $0x68] sm:$0xf]
    %v81 = vld [vmem:[#allocation2 + $0x6c] sm:$0xf]
    %v82 = vld [vmem:[#allocation2 + $0x70] sm:$0xf]
    %v83 = vld [vmem:[#allocation2 + $0x74] sm:$0xf]
    %v84 = vld [vmem:[#allocation2 + $0x78] sm:$0xf]
    %v85 = vld [vmem:[#allocation2 + $0x7c] sm:$0xf]
    %v86 = vld [vmem:[#allocation2 + $0x80] sm:$0xf]
    %v87 = vld [vmem:[#allocation2 + $0x84] sm:$0xf]
    %v88 = vld [vmem:[#allocation2 + $0x88] sm:$0xf]
    %v89 = vld [vmem:[#allocation2 + $0x8c] sm:$0xf]
    %v90 = vld [vmem:[#allocation2 + $0x90] sm:$0xf]
    %v91 = vld [vmem:[#allocation2 + $0x94] sm:$0xf]
    %v92 = vld [vmem:[#allocation2 + $0x98] sm:$0xf]
    %v93 = vld [vmem:[#allocation2 + $0x9c] sm:$0xf]
    %v94 = vld [vmem:[#allocation2 + $0xa0] sm:$0xf]
    %v95 = vld [vmem:[#allocation2 + $0xa4] sm:$0xf]
    %v96 = vld [vmem:[#allocation2 + $0xa8] sm:$0xf]
    %v97 = vld [vmem:[#allocation2 + $0xac] sm:$0xf]
    %v98 = vld [vmem:[#allocation2 + $0xb0] sm:$0xf]
    %v99 = vld [vmem:[#allocation2 + $0xb4] sm:$0xf]
    %v100 = vld [vmem:[#allocation2 + $0xb8] sm:$0xf]
    %v101 = vld [vmem:[#allocation2 + $0xbc] sm:$0xf]
    %v102 = vld [vmem:[#allocation2 + $0xc0] sm:$0xf]
    %v103 = vld [vmem:[#allocation2 + $0xc4] sm:$0xf]
    %v104 = vld [vmem:[%s3] sm:$0xf]
    %v105 = vld [vmem:[%s3 + $0x4] sm:$0xf]
    %v106 = vld [vmem:[%s3 + $0x8] sm:$0xf]
    %v107 = vld [vmem:[%s3 + $0xc] sm:$0xf]
    %v108 = vld [vmem:[%s3 + $0x10] sm:$0xf]
    %v109 = vld [vmem:[%s3 + $0x14] sm:$0xf]
    %v110 = vld [vmem:[%s3 + $0x18] sm:$0xf]
    %v111 = vld [vmem:[%s3 + $0x1c] sm:$0xf]
    %v112 = vld [vmem:[%s3 + $0x20] sm:$0xf]
    %v113 = vld [vmem:[%s3 + $0x24] sm:$0xf]
    %v114 = vld [vmem:[%s3 + $0x28] sm:$0xf]
    %v115 = vld [vmem:[%s3 + $0x2c] sm:$0xf]
    %v116 = vld [vmem:[%s3 + $0x30] sm:$0x3]
    %v117 = vld [vmem:[%s4] sm:$0x1]
    %v118 = vld [vmem:[%s5] sm:$0xf]
    %v119 = vld [vmem:[%s5 + $0x4] sm:$0xf]
    %v120 = vld [vmem:[%s5 + $0x8] sm:$0xf]
    %v121 = vld [vmem:[%s5 + $0xc] sm:$0xf]
    %v122 = vld [vmem:[%s5 + $0x10] sm:$0xf]
    %v123 = vld [vmem:[%s5 + $0x14] sm:$0xf]
    %v124 = vld [vmem:[%s5 + $0x18] sm:$0xf]
    %v125 = vld [vmem:[%s5 + $0x1c] sm:$0xf]
    %v126 = vld [vmem:[%s5 + $0x20] sm:$0xf]
    %v127 = vld [vmem:[%s5 + $0x24] sm:$0xf]
    %v128 = vld [vmem:[%s5 + $0x28] sm:$0xf]
    %v129 = vld [vmem:[%s5 + $0x2c] sm:$0xf]
    %v130 = vld [vmem:[%s5 + $0x30] sm:$0xf]
    %v131 = vld [vmem:[%s5 + $0x34] sm:$0xf]
    %v132 = vld [vmem:[%s5 + $0x38] sm:$0xf]
    %v133 = vld [vmem:[%s5 + $0x3c] sm:$0xf]
    %v134 = vld [vmem:[%s6] sm:$0x1]
    %v135 = vld [vmem:[%s7] sm:$0x1]
    %v136 = vld [vmem:[%s8] sm:$0x1]
    %v139 = vunpack.c.l.s4 1966171168
    %v140 = vunpack.c.0.s8 %v139
    %v141 = vlaneseq
    %v142 = vshrl.u32 %v141, 7
    %v143 = vsub.s32 %v140, %v142
    %v144 = vrot.slane %v51, %v143
    %v145 = vcombine.high %v144, %v144
    %v147 = vunpack.c.l.s4 1966171168
    %v148 = vunpack.c.0.s8 %v147
    %v149 = vlaneseq
    %v150 = vshrl.u32 %v149, 7
    %v151 = vsub.s32 %v148, %v150
    %v152 = vrot.slane %v144, %v151
    %v154 = vunpack.c.l.s4 1966171168
    %v155 = vunpack.c.0.s8 %v154
    %v156 = vlaneseq
    %v157 = vshrl.u32 %v156, 7
    %v158 = vsub.s32 %v155, %v157
    %v159 = vrot.slane %v145, %v158
    %v160 = vcombine.high %v152, %v152
    %v161 = vcombine.high %v159, %v159
    %v215 = vunpack.c.l.b16 %v54
    %v216 = vunpack.c.l.b16 %v55
    %v217 = vunpack.c.l.b16 %v56
    %v218 = vunpack.c.l.b16 %v57
    %v219 = vunpack.c.l.b16 %v58
    %v220 = vunpack.c.l.b16 %v59
    %v221 = vunpack.c.l.b16 %v60
    %v222 = vunpack.c.l.b16 %v61
    %v223 = vunpack.c.l.b16 %v62
    %v224 = vunpack.c.l.b16 %v63
    %v225 = vunpack.c.l.b16 %v64
    %v226 = vunpack.c.l.b16 %v65
    %v227 = vunpack.c.l.b16 %v66
    %v228 = vunpack.c.l.b16 %v67
    %v229 = vunpack.c.l.b16 %v68
    %v230 = vunpack.c.l.b16 %v69
    %v231 = vunpack.c.l.b16 %v70
    %v232 = vunpack.c.l.b16 %v71
    %v233 = vunpack.c.l.b16 %v72
    %v234 = vunpack.c.l.b16 %v73
    %v235 = vunpack.c.l.b16 %v74
    %v236 = vunpack.c.l.b16 %v75
    %v237 = vunpack.c.l.b16 %v76
    %v238 = vunpack.c.l.b16 %v77
    %v239 = vunpack.c.l.b16 %v78
    %v240 = vunpack.c.l.b16 %v79
    %v241 = vunpack.c.l.b16 %v80
    %v242 = vunpack.c.l.b16 %v81
    %v243 = vunpack.c.l.b16 %v82
    %v244 = vunpack.c.l.b16 %v83
    %v245 = vunpack.c.l.b16 %v84
    %v246 = vunpack.c.l.b16 %v85
    %v247 = vunpack.c.l.b16 %v86
    %v248 = vunpack.c.l.b16 %v87
    %v249 = vunpack.c.l.b16 %v88
    %v250 = vunpack.c.l.b16 %v89
    %v251 = vunpack.c.l.b16 %v90
    %v252 = vunpack.c.l.b16 %v91
    %v253 = vunpack.c.l.b16 %v92
    %v254 = vunpack.c.l.b16 %v93
    %v255 = vunpack.c.l.b16 %v94
    %v256 = vunpack.c.l.b16 %v95
    %v257 = vunpack.c.l.b16 %v96
    %v258 = vunpack.c.l.b16 %v97
    %v259 = vunpack.c.l.b16 %v98
    %v260 = vunpack.c.l.b16 %v99
    %v261 = vunpack.c.l.b16 %v100
    %v262 = vunpack.c.l.b16 %v101
    %v263 = vunpack.c.l.b16 %v102
    %v264 = vunpack.c.l.b16 %v103
    %v265 = vpack.c.b16 %v216, %v215
    %v266 = vpack.c.b16 %v218, %v217
    %v267 = vpack.c.b16 %v220, %v219
    %v268 = vpack.c.b16 %v222, %v221
    %v269 = vpack.c.b16 %v224, %v223
    %v270 = vpack.c.b16 %v226, %v225
    %v271 = vpack.c.b16 %v228, %v227
    %v272 = vpack.c.b16 %v230, %v229
    %v273 = vpack.c.b16 %v232, %v231
    %v274 = vpack.c.b16 %v234, %v233
    %v275 = vpack.c.b16 %v236, %v235
    %v276 = vpack.c.b16 %v238, %v237
    %v277 = vpack.c.b16 %v240, %v239
    %v278 = vpack.c.b16 %v242, %v241
    %v279 = vpack.c.b16 %v244, %v243
    %v280 = vpack.c.b16 %v246, %v245
    %v281 = vpack.c.b16 %v248, %v247
    %v282 = vpack.c.b16 %v250, %v249
    %v283 = vpack.c.b16 %v252, %v251
    %v284 = vpack.c.b16 %v254, %v253
    %v285 = vpack.c.b16 %v256, %v255
    %v286 = vpack.c.b16 %v258, %v257
    %v287 = vpack.c.b16 %v260, %v259
    %v288 = vpack.c.b16 %v262, %v261
    %v289 = vpack.c.b16 %v264, %v263
    %vm315 = vcmask 130048
    %v317 = vsel %vm315, %v161, 0
    %319 = vmatprep.subr.bf16.mxu0 0
    %320 = vmatpush1.bf16.msra.mxu0 %v272
    %321 = vmatprep.subr.bf16.mxu0 0
    %322 = vmatpush1.bf16.msra.mxu0 %v271
    %323 = vmatprep.subr.bf16.mxu0 0
    %324 = vmatpush1.bf16.msra.mxu0 %v270
    %325 = vmatprep.subr.bf16.mxu0 0
    %326 = vmatpush1.bf16.msra.mxu0 %v269
    %327 = vmatprep.subr.bf16.mxu0 0
    %328 = vmatpush1.bf16.msra.mxu0 %v268
    %329 = vmatprep.subr.bf16.mxu0 0
    %330 = vmatpush1.bf16.msra.mxu0 %v267
    %331 = vmatprep.subr.bf16.mxu0 0
    %332 = vmatpush1.bf16.msra.mxu0 %v266
    %333 = vmatprep.subr.bf16.mxu0 0
    %334 = vmatpush1.bf16.msra.mxu0 %v265
    %335 = vmatprep.subr.bf16.mxu0 0
    %336 = vmatpush2.bf16.msra.mxu0 %v280
    %337 = vmatprep.subr.bf16.mxu0 0
    %338 = vmatpush2.bf16.msra.mxu0 %v279
    %339 = vmatprep.subr.bf16.mxu0 0
    %340 = vmatpush2.bf16.msra.mxu0 %v278
    %341 = vmatprep.subr.bf16.mxu0 0
    %342 = vmatpush2.bf16.msra.mxu0 %v277
    %343 = vmatprep.subr.bf16.mxu0 0
    %344 = vmatpush2.bf16.msra.mxu0 %v276
    %345 = vmatprep.subr.bf16.mxu0 0
    %346 = vmatpush2.bf16.msra.mxu0 %v275
    %347 = vmatprep.subr.bf16.mxu0 0
    %348 = vmatpush2.bf16.msra.mxu0 %v274
    %349 = vmatprep.subr.bf16.mxu0 0
    %350 = vmatpush2.bf16.msra.mxu0 %v273
    %351 = vmatprep.mubr.bf16.mxu0 %v159
    %352 = vmatmul.mubr.bf16.gmra.mxu0 %v152
    %v353 = vpop.f32.mrf.mxu0
    %v354 = vadd.f32 0.0, %v353
    %v355 = vpop.f32.mrf.mxu0
    %v356 = vpop.f32.mrf.mxu0
    %v357 = vpop.f32.mrf.mxu0
    %358 = vdwg.mxu0
    %359 = vmatprep.subr.bf16.mxu0 0
    %360 = vmatpush1.bf16.msra.mxu0 %v288
    %361 = vmatprep.subr.bf16.mxu0 0
    %362 = vmatpush1.bf16.msra.mxu0 %v287
    %363 = vmatprep.subr.bf16.mxu0 0
    %364 = vmatpush1.bf16.msra.mxu0 %v286
    %365 = vmatprep.subr.bf16.mxu0 0
    %366 = vmatpush1.bf16.msra.mxu0 %v285
    %367 = vmatprep.subr.bf16.mxu0 0
    %368 = vmatpush1.bf16.msra.mxu0 %v284
    %369 = vmatprep.subr.bf16.mxu0 0
    %370 = vmatpush1.bf16.msra.mxu0 %v283
    %371 = vmatprep.subr.bf16.mxu0 0
    %372 = vmatpush1.bf16.msra.mxu0 %v282
    %373 = vmatprep.subr.bf16.mxu0 0
    %374 = vmatpush1.bf16.msra.mxu0 %v281
    %375 = vmatprep.subr.bf16.mxu0 0
    %376 = vmatpush2.bf16.msra.mxu0 0
    %377 = vmatprep.subr.bf16.mxu0 0
    %378 = vmatpush2.bf16.msra.mxu0 0
    %379 = vmatprep.subr.bf16.mxu0 0
    %380 = vmatpush2.bf16.msra.mxu0 0
    %381 = vmatprep.subr.bf16.mxu0 0
    %382 = vmatpush2.bf16.msra.mxu0 0
    %383 = vmatprep.subr.bf16.mxu0 0
    %384 = vmatpush2.bf16.msra.mxu0 0
    %385 = vmatprep.subr.bf16.mxu0 0
    %386 = vmatpush2.bf16.msra.mxu0 0
    %387 = vmatprep.subr.bf16.mxu0 0
    %388 = vmatpush2.bf16.msra.mxu0 0
    %389 = vmatprep.subr.bf16.mxu0 0
    %390 = vmatpush2.bf16.msra.mxu0 %v289
    %391 = vmatprep.mubr.bf16.mxu0 %v317
    %392 = vmatmul.mubr.bf16.gmra.mxu0 %v160
    %v393 = vpop.f32.mrf.mxu0
    %v394 = vadd.f32 %v354, %v393
    %v395 = vpop.f32.mrf.mxu0
    %v396 = vpop.f32.mrf.mxu0
    %v397 = vpop.f32.mrf.mxu0
    %398 = vdwg.mxu0
    %v401 = vunpack.c.l.b16 %v52
    %v402 = vunpack.c.l.b16 %v53
    %v403 = vpack.c.b16 %v402, %v401
    %v417 = vunpack.c.l.b16 %v104
    %v418 = vunpack.c.l.b16 %v105
    %v419 = vunpack.c.l.b16 %v106
    %v420 = vunpack.c.l.b16 %v107
    %v421 = vunpack.c.l.b16 %v108
    %v422 = vunpack.c.l.b16 %v109
    %v423 = vunpack.c.l.b16 %v110
    %v424 = vunpack.c.l.b16 %v111
    %v425 = vunpack.c.l.b16 %v112
    %v426 = vunpack.c.l.b16 %v113
    %v427 = vunpack.c.l.b16 %v114
    %v428 = vunpack.c.l.b16 %v115
    %v429 = vunpack.c.l.b16 %v116
    %v430 = vpack.c.b16 %v418, %v417
    %v431 = vpack.c.b16 %v420, %v419
    %v432 = vpack.c.b16 %v422, %v421
    %v433 = vpack.c.b16 %v424, %v423
    %v434 = vpack.c.b16 %v426, %v425
    %v435 = vpack.c.b16 %v428, %v427
    %v436 = vpack.c.b16 %v429, %v429
    %vm443 = vcmask 818176
    %v445 = vsel %vm443, %v403, 0
    %vm447 = vcmask 1041408
    %v449 = vsel %vm447, %v436, 0
    %451 = vmatprep.subr.bf16.mxu0 0
    %452 = vmatpush1.bf16.msra.mxu0 0
    %453 = vmatprep.subr.bf16.mxu0 0
    %454 = vmatpush1.bf16.msra.mxu0 %v449
    %455 = vmatprep.subr.bf16.mxu0 0
    %456 = vmatpush1.bf16.msra.mxu0 %v435
    %457 = vmatprep.subr.bf16.mxu0 0
    %458 = vmatpush1.bf16.msra.mxu0 %v434
    %459 = vmatprep.subr.bf16.mxu0 0
    %460 = vmatpush1.bf16.msra.mxu0 %v433
    %461 = vmatprep.subr.bf16.mxu0 0
    %462 = vmatpush1.bf16.msra.mxu0 %v432
    %463 = vmatprep.subr.bf16.mxu0 0
    %464 = vmatpush1.bf16.msra.mxu0 %v431
    %465 = vmatprep.subr.bf16.mxu0 0
    %466 = vmatpush1.bf16.msra.mxu0 %v430
    %467 = vmatprep.subr.bf16.mxu0 0
    %468 = vmatpush2.bf16.msra.mxu0 0
    %469 = vmatprep.subr.bf16.mxu0 0
    %470 = vmatpush2.bf16.msra.mxu0 0
    %471 = vmatprep.subr.bf16.mxu0 0
    %472 = vmatpush2.bf16.msra.mxu0 0
    %473 = vmatprep.subr.bf16.mxu0 0
    %474 = vmatpush2.bf16.msra.mxu0 0
    %475 = vmatprep.subr.bf16.mxu0 0
    %476 = vmatpush2.bf16.msra.mxu0 0
    %477 = vmatprep.subr.bf16.mxu0 0
    %478 = vmatpush2.bf16.msra.mxu0 0
    %479 = vmatprep.subr.bf16.mxu0 0
    %480 = vmatpush2.bf16.msra.mxu0 0
    %481 = vmatprep.subr.bf16.mxu0 0
    %482 = vmatpush2.bf16.msra.mxu0 0
    %483 = vmatprep.mubr.bf16.mxu0 0
    %484 = vmatmul.mubr.bf16.gmra.mxu0 %v445
    %v485 = vpop.f32.mrf.mxu0
    %v486 = vadd.f32 0.0, %v485
    %v487 = vpop.f32.mrf.mxu0
    %v488 = vpop.f32.mrf.mxu0
    %v489 = vadd.f32 0.0, %v488
    %v490 = vpop.f32.mrf.mxu0
    %491 = vdwg.mxu0
    %v494 = vunpack.c.l.s4 1966171168
    %v495 = vunpack.c.0.s8 %v494
    %v496 = vlaneseq
    %v497 = vshrl.u32 %v496, 7
    %v498 = vsub.s32 %v495, %v497
    %v499 = vrot.slane %v394, %v498
    %v500 = vcombine.high %v499, %v499
    %v502 = vunpack.c.l.s4 1966171168
    %v503 = vunpack.c.0.s8 %v502
    %v504 = vlaneseq
    %v505 = vshrl.u32 %v504, 7
    %v506 = vsub.s32 %v503, %v505
    %v507 = vrot.slane %v499, %v506
    %v509 = vunpack.c.l.s4 1966171168
    %v510 = vunpack.c.0.s8 %v509
    %v511 = vlaneseq
    %v512 = vshrl.u32 %v511, 7
    %v513 = vsub.s32 %v510, %v512
    %v514 = vrot.slane %v500, %v513
    %v515 = vlaneseq
    %v516 = vshrl.u32 %v515, 7
    %v517 = vsub.s32 0, %v516
    %v518 = vrot.slane %v507, %v517
    %v519 = vlaneseq
    %v520 = vshrl.u32 %v519, 7
    %v521 = vsub.s32 0, %v520
    %v522 = vrot.slane %v514, %v521
    %v525 = vadd.f32 %v486, %v518
    %v526 = vadd.f32 %v489, %v522
    %v528 = vlaneseq
    %v529 = vshrl.u32 %v528, 7
    %v530 = vsub.s32 0, %v529
    %v531 = vrot.slane %v117, %v530
    %v533 = vadd.f32 %v525, %v531
    %v534 = vadd.f32 %v526, %v531
    %vm535 = vcmp.gt.f32.partialorder %v533, 0.0
    %vm536 = vcmp.gt.f32.partialorder %v534, 0.0
    %v537 = vmin.f32 %v533, 0.0
    %v538 = vmin.f32 %v534, 0.0
    %v539 = vmul.f32 %v537, 1.442695
    %v540 = vpow.pop %v539
    %v541 = vmul.f32 %v538, 1.442695
    %v542 = vpow.pop %v541
    %v543 = vsub.f32 %v540, 1.0
    %v544 = vsub.f32 %v542, 1.0
    %v545 = vsel %vm535, %v533, %v543
    %v546 = vsel %vm536, %v534, %v544
    %v547 = vpack.c.bf16 %v545, %v545
    %v548 = vpack.c.bf16 %v546, %v546
    %v550 = vlaneseq
    %v551 = vshrl.u32 %v550, 7
    %v552 = vsub.s32 0, %v551
    %v553 = vrot.slane %v134, %v552
    %v557 = vunpack.c.l.b16 %v547
    %v558 = vunpack.c.l.b16 %v548
    %v559 = vpack.c.b16 %v558, %v557
    %v577 = vunpack.c.l.b16 %v118
    %v578 = vunpack.c.l.b16 %v119
    %v579 = vunpack.c.l.b16 %v120
    %v580 = vunpack.c.l.b16 %v121
    %v581 = vunpack.c.l.b16 %v122
    %v582 = vunpack.c.l.b16 %v123
    %v583 = vunpack.c.l.b16 %v124
    %v584 = vunpack.c.l.b16 %v125
    %v585 = vunpack.c.l.b16 %v126
    %v586 = vunpack.c.l.b16 %v127
    %v587 = vunpack.c.l.b16 %v128
    %v588 = vunpack.c.l.b16 %v129
    %v589 = vunpack.c.l.b16 %v130
    %v590 = vunpack.c.l.b16 %v131
    %v591 = vunpack.c.l.b16 %v132
    %v592 = vunpack.c.l.b16 %v133
    %v593 = vpack.c.b16 %v578, %v577
    %v594 = vpack.c.b16 %v580, %v579
    %v595 = vpack.c.b16 %v582, %v581
    %v596 = vpack.c.b16 %v584, %v583
    %v597 = vpack.c.b16 %v586, %v585
    %v598 = vpack.c.b16 %v588, %v587
    %v599 = vpack.c.b16 %v590, %v589
    %v600 = vpack.c.b16 %v592, %v591
    %609 = vmatprep.subr.bf16.mxu0 0
    %610 = vmatpush1.bf16.msra.mxu0 %v600
    %611 = vmatprep.subr.bf16.mxu0 0
    %612 = vmatpush1.bf16.msra.mxu0 %v599
    %613 = vmatprep.subr.bf16.mxu0 0
    %614 = vmatpush1.bf16.msra.mxu0 %v598
    %615 = vmatprep.subr.bf16.mxu0 0
    %616 = vmatpush1.bf16.msra.mxu0 %v597
    %617 = vmatprep.subr.bf16.mxu0 0
    %618 = vmatpush1.bf16.msra.mxu0 %v596
    %619 = vmatprep.subr.bf16.mxu0 0
    %620 = vmatpush1.bf16.msra.mxu0 %v595
    %621 = vmatprep.subr.bf16.mxu0 0
    %622 = vmatpush1.bf16.msra.mxu0 %v594
    %623 = vmatprep.subr.bf16.mxu0 0
    %624 = vmatpush1.bf16.msra.mxu0 %v593
    %625 = vmatprep.subr.bf16.mxu0 0
    %626 = vmatpush2.bf16.msra.mxu0 0
    %627 = vmatprep.subr.bf16.mxu0 0
    %628 = vmatpush2.bf16.msra.mxu0 0
    %629 = vmatprep.subr.bf16.mxu0 0
    %630 = vmatpush2.bf16.msra.mxu0 0
    %631 = vmatprep.subr.bf16.mxu0 0
    %632 = vmatpush2.bf16.msra.mxu0 0
    %633 = vmatprep.subr.bf16.mxu0 0
    %634 = vmatpush2.bf16.msra.mxu0 0
    %635 = vmatprep.subr.bf16.mxu0 0
    %636 = vmatpush2.bf16.msra.mxu0 0
    %637 = vmatprep.subr.bf16.mxu0 0
    %638 = vmatpush2.bf16.msra.mxu0 0
    %639 = vmatprep.subr.bf16.mxu0 0
    %640 = vmatpush2.bf16.msra.mxu0 0
    %641 = vmatprep.mubr.bf16.mxu0 0
    %642 = vmatmul.mubr.bf16.gmra.mxu0 %v559
    %v643 = vpop.f32.mrf.mxu0
    %v644 = vadd.f32 %v553, %v643
    %v645 = vpop.f32.mrf.mxu0
    %v646 = vpop.f32.mrf.mxu0
    %v647 = vadd.f32 %v553, %v646
    %v648 = vpop.f32.mrf.mxu0
    %649 = vdwg.mxu0
    %vm650 = vcmp.gt.f32.partialorder %v644, 0.0
    %vm651 = vcmp.gt.f32.partialorder %v647, 0.0
    %v652 = vmin.f32 %v644, 0.0
    %v653 = vmin.f32 %v647, 0.0
    %v654 = vmul.f32 %v652, 1.442695
    %v655 = vpow.pop %v654
    %v656 = vmul.f32 %v653, 1.442695
    %v657 = vpow.pop %v656
    %v658 = vsub.f32 %v655, 1.0
    %v659 = vsub.f32 %v657, 1.0
    %v660 = vsel %vm650, %v644, %v658
    %v661 = vsel %vm651, %v647, %v659
    %v663 = vlaneseq
    %v664 = vshrl.u32 %v663, 7
    %v665 = vsub.s32 0, %v664
    %v666 = vrot.slane %v135, %v665
    %v668 = vmul.f32 %v660, %v666
    %v669 = vmul.f32 %v661, %v666
    %670 = vadd.xlane.f32.xlu0 %v668
    %v671 = vpop.xlane.xlu0 %670
    %672 = vadd.xlane.f32.xlu0 %v669
    %v673 = vpop.xlane.xlu0 %672
    %v675 = vlaneseq
    %v676 = vshrl.u32 %v675, 7
    %v677 = vsub.s32 0, %v676
    %v678 = vrot.slane %v136, %v677
    %679 = vset.pattern.permute.xlu0 0
    %680 = vperm.xlu0 %679, %v678
    %v681 = vpop.permute.xlu0 %680
    %v683 = vadd.f32 %v671, %v681
    %v684 = vadd.f32 %v673, %v681
    %v685 = vsub.f32 0.0, %v683
    %v686 = vsub.f32 0.0, %v684
    %v687 = vmul.f32 %v685, 1.442695
    %v688 = vpow.pop %v687
    %v689 = vmul.f32 %v686, 1.442695
    %v690 = vpow.pop %v689
    %v691 = vadd.f32 %v688, 1.0
    %v692 = vadd.f32 %v690, 1.0
    %v693 = vrcp.pop %v691
    %v694 = vrcp.pop %v692
    %v697 = vlaneseq
    %v698 = vand.u32 %v697, 127
    %v699 = vlaneseq
    %v700 = vshrl.u32 %v699, 7
    %v701 = vsub.s32 %v698, %v700
    %v702 = vrot.slane %v693, %v701
    %v703 = vlaneseq
    %v704 = vshrl.u32 %v703, 7
    %v705 = vsub.s32 %v698, %v704
    %v706 = vrot.slane %v694, %v705
    %vm707 = vcmask 1041409
    %v708 = vsel %vm707, %v706, %v702
    %vm710 = vcmask 58368
    %711 = vst.msk [vmem:[#allocation5] sm:$0x3] %vm710, %v708
    %s712 = scalar_lea.vmem [#allocation2], 200
    %v713 = vld [vmem:[%s712] sm:$0xf]
    %v714 = vld [vmem:[%s712 + $0x4] sm:$0xf]
    %v715 = vld [vmem:[%s712 + $0x8] sm:$0xf]
    %v716 = vld [vmem:[%s712 + $0xc] sm:$0xf]
    %v717 = vld [vmem:[%s712 + $0x10] sm:$0xf]
    %v718 = vld [vmem:[%s712 + $0x14] sm:$0xf]
    %v719 = vld [vmem:[%s712 + $0x18] sm:$0xf]
    %v720 = vld [vmem:[%s712 + $0x1c] sm:$0xf]
    %v721 = vld [vmem:[%s712 + $0x20] sm:$0xf]
    %v722 = vld [vmem:[%s712 + $0x24] sm:$0xf]
    %v723 = vld [vmem:[%s712 + $0x28] sm:$0xf]
    %v724 = vld [vmem:[%s712 + $0x2c] sm:$0xf]
    %v725 = vld [vmem:[%s712 + $0x30] sm:$0xf]
    %v726 = vld [vmem:[%s712 + $0x34] sm:$0xf]
    %v727 = vld [vmem:[%s712 + $0x38] sm:$0xf]
    %v728 = vld [vmem:[%s712 + $0x3c] sm:$0xf]
    %v729 = vld [vmem:[%s712 + $0x40] sm:$0xf]
    %v730 = vld [vmem:[%s712 + $0x44] sm:$0xf]
    %v731 = vld [vmem:[%s712 + $0x48] sm:$0xf]
    %v732 = vld [vmem:[%s712 + $0x4c] sm:$0xf]
    %v733 = vld [vmem:[%s712 + $0x50] sm:$0xf]
    %v734 = vld [vmem:[%s712 + $0x54] sm:$0xf]
    %v735 = vld [vmem:[%s712 + $0x58] sm:$0xf]
    %v736 = vld [vmem:[%s712 + $0x5c] sm:$0xf]
    %v737 = vld [vmem:[%s712 + $0x60] sm:$0xf]
    %v738 = vld [vmem:[%s712 + $0x64] sm:$0xf]
    %v739 = vld [vmem:[%s712 + $0x68] sm:$0xf]
    %v740 = vld [vmem:[%s712 + $0x6c] sm:$0xf]
    %v741 = vld [vmem:[%s712 + $0x70] sm:$0xf]
    %v742 = vld [vmem:[%s712 + $0x74] sm:$0xf]
    %v743 = vld [vmem:[%s712 + $0x78] sm:$0xf]
    %v744 = vld [vmem:[%s712 + $0x7c] sm:$0xf]
    %v745 = vld [vmem:[%s712 + $0x80] sm:$0xf]
    %v746 = vld [vmem:[%s712 + $0x84] sm:$0xf]
    %v747 = vld [vmem:[%s712 + $0x88] sm:$0xf]
    %v748 = vld [vmem:[%s712 + $0x8c] sm:$0xf]
    %v749 = vld [vmem:[%s712 + $0x90] sm:$0xf]
    %v750 = vld [vmem:[%s712 + $0x94] sm:$0xf]
    %v751 = vld [vmem:[%s712 + $0x98] sm:$0xf]
    %v752 = vld [vmem:[%s712 + $0x9c] sm:$0xf]
    %v753 = vld [vmem:[%s712 + $0xa0] sm:$0xf]
    %v754 = vld [vmem:[%s712 + $0xa4] sm:$0xf]
    %v755 = vld [vmem:[%s712 + $0xa8] sm:$0xf]
    %v756 = vld [vmem:[%s712 + $0xac] sm:$0xf]
    %v757 = vld [vmem:[%s712 + $0xb0] sm:$0xf]
    %v758 = vld [vmem:[%s712 + $0xb4] sm:$0xf]
    %v759 = vld [vmem:[%s712 + $0xb8] sm:$0xf]
    %v760 = vld [vmem:[%s712 + $0xbc] sm:$0xf]
    %v761 = vld [vmem:[%s712 + $0xc0] sm:$0xf]
    %v762 = vld [vmem:[%s712 + $0xc4] sm:$0xf]
    %s763 = scalar_lea.vmem %s3, 52
    %v764 = vld [vmem:[%s763] sm:$0xf]
    %v765 = vld [vmem:[%s763 + $0x4] sm:$0xf]
    %v766 = vld [vmem:[%s763 + $0x8] sm:$0xf]
    %v767 = vld [vmem:[%s763 + $0xc] sm:$0xf]
    %v768 = vld [vmem:[%s763 + $0x10] sm:$0xf]
    %v769 = vld [vmem:[%s763 + $0x14] sm:$0xf]
    %v770 = vld [vmem:[%s763 + $0x18] sm:$0xf]
    %v771 = vld [vmem:[%s763 + $0x1c] sm:$0xf]
    %v772 = vld [vmem:[%s763 + $0x20] sm:$0xf]
    %v773 = vld [vmem:[%s763 + $0x24] sm:$0xf]
    %v774 = vld [vmem:[%s763 + $0x28] sm:$0xf]
    %v775 = vld [vmem:[%s763 + $0x2c] sm:$0xf]
    %v776 = vld [vmem:[%s763 + $0x30] sm:$0x3]
    %s777 = scalar_lea.vmem %s4, 1
    %v778 = vld [vmem:[%s777] sm:$0x1]
    %s779 = scalar_lea.vmem %s5, 64
    %v780 = vld [vmem:[%s779] sm:$0xf]
    %v781 = vld [vmem:[%s779 + $0x4] sm:$0xf]
    %v782 = vld [vmem:[%s779 + $0x8] sm:$0xf]
    %v783 = vld [vmem:[%s779 + $0xc] sm:$0xf]
    %v784 = vld [vmem:[%s779 + $0x10] sm:$0xf]
    %v785 = vld [vmem:[%s779 + $0x14] sm:$0xf]
    %v786 = vld [vmem:[%s779 + $0x18] sm:$0xf]
    %v787 = vld [vmem:[%s779 + $0x1c] sm:$0xf]
    %v788 = vld [vmem:[%s779 + $0x20] sm:$0xf]
    %v789 = vld [vmem:[%s779 + $0x24] sm:$0xf]
    %v790 = vld [vmem:[%s779 + $0x28] sm:$0xf]
    %v791 = vld [vmem:[%s779 + $0x2c] sm:$0xf]
    %v792 = vld [vmem:[%s779 + $0x30] sm:$0xf]
    %v793 = vld [vmem:[%s779 + $0x34] sm:$0xf]
    %v794 = vld [vmem:[%s779 + $0x38] sm:$0xf]
    %v795 = vld [vmem:[%s779 + $0x3c] sm:$0xf]
    %s796 = scalar_lea.vmem %s6, 1
    %v797 = vld [vmem:[%s796] sm:$0x1]
    %s798 = scalar_lea.vmem %s7, 1
    %v799 = vld [vmem:[%s798] sm:$0x1]
    %s800 = scalar_lea.vmem %s8, 1
    %v801 = vld [vmem:[%s800] sm:$0x1]
    %v852 = vunpack.c.l.b16 %v713
    %v853 = vunpack.c.l.b16 %v714
    %v854 = vunpack.c.l.b16 %v715
    %v855 = vunpack.c.l.b16 %v716
    %v856 = vunpack.c.l.b16 %v717
    %v857 = vunpack.c.l.b16 %v718
    %v858 = vunpack.c.l.b16 %v719
    %v859 = vunpack.c.l.b16 %v720
    %v860 = vunpack.c.l.b16 %v721
    %v861 = vunpack.c.l.b16 %v722
    %v862 = vunpack.c.l.b16 %v723
    %v863 = vunpack.c.l.b16 %v724
    %v864 = vunpack.c.l.b16 %v725
    %v865 = vunpack.c.l.b16 %v726
    %v866 = vunpack.c.l.b16 %v727
    %v867 = vunpack.c.l.b16 %v728
    %v868 = vunpack.c.l.b16 %v729
    %v869 = vunpack.c.l.b16 %v730
    %v870 = vunpack.c.l.b16 %v731
    %v871 = vunpack.c.l.b16 %v732
    %v872 = vunpack.c.l.b16 %v733
    %v873 = vunpack.c.l.b16 %v734
    %v874 = vunpack.c.l.b16 %v735
    %v875 = vunpack.c.l.b16 %v736
    %v876 = vunpack.c.l.b16 %v737
    %v877 = vunpack.c.l.b16 %v738
    %v878 = vunpack.c.l.b16 %v739
    %v879 = vunpack.c.l.b16 %v740
    %v880 = vunpack.c.l.b16 %v741
    %v881 = vunpack.c.l.b16 %v742
    %v882 = vunpack.c.l.b16 %v743
    %v883 = vunpack.c.l.b16 %v744
    %v884 = vunpack.c.l.b16 %v745
    %v885 = vunpack.c.l.b16 %v746
    %v886 = vunpack.c.l.b16 %v747
    %v887 = vunpack.c.l.b16 %v748
    %v888 = vunpack.c.l.b16 %v749
    %v889 = vunpack.c.l.b16 %v750
    %v890 = vunpack.c.l.b16 %v751
    %v891 = vunpack.c.l.b16 %v752
    %v892 = vunpack.c.l.b16 %v753
    %v893 = vunpack.c.l.b16 %v754
    %v894 = vunpack.c.l.b16 %v755
    %v895 = vunpack.c.l.b16 %v756
    %v896 = vunpack.c.l.b16 %v757
    %v897 = vunpack.c.l.b16 %v758
    %v898 = vunpack.c.l.b16 %v759
    %v899 = vunpack.c.l.b16 %v760
    %v900 = vunpack.c.l.b16 %v761
    %v901 = vunpack.c.l.b16 %v762
    %v902 = vpack.c.b16 %v853, %v852
    %v903 = vpack.c.b16 %v855, %v854
    %v904 = vpack.c.b16 %v857, %v856
    %v905 = vpack.c.b16 %v859, %v858
    %v906 = vpack.c.b16 %v861, %v860
    %v907 = vpack.c.b16 %v863, %v862
    %v908 = vpack.c.b16 %v865, %v864
    %v909 = vpack.c.b16 %v867, %v866
    %v910 = vpack.c.b16 %v869, %v868
    %v911 = vpack.c.b16 %v871, %v870
    %v912 = vpack.c.b16 %v873, %v872
    %v913 = vpack.c.b16 %v875, %v874
    %v914 = vpack.c.b16 %v877, %v876
    %v915 = vpack.c.b16 %v879, %v878
    %v916 = vpack.c.b16 %v881, %v880
    %v917 = vpack.c.b16 %v883, %v882
    %v918 = vpack.c.b16 %v885, %v884
    %v919 = vpack.c.b16 %v887, %v886
    %v920 = vpack.c.b16 %v889, %v888
    %v921 = vpack.c.b16 %v891, %v890
    %v922 = vpack.c.b16 %v893, %v892
    %v923 = vpack.c.b16 %v895, %v894
    %v924 = vpack.c.b16 %v897, %v896
    %v925 = vpack.c.b16 %v899, %v898
    %v926 = vpack.c.b16 %v901, %v900
    %952 = vmatprep.subr.bf16.mxu0 0
    %953 = vmatpush1.bf16.msra.mxu0 %v909
    %954 = vmatprep.subr.bf16.mxu0 0
    %955 = vmatpush1.bf16.msra.mxu0 %v908
    %956 = vmatprep.subr.bf16.mxu0 0
    %957 = vmatpush1.bf16.msra.mxu0 %v907
    %958 = vmatprep.subr.bf16.mxu0 0
    %959 = vmatpush1.bf16.msra.mxu0 %v906
    %960 = vmatprep.subr.bf16.mxu0 0
    %961 = vmatpush1.bf16.msra.mxu0 %v905
    %962 = vmatprep.subr.bf16.mxu0 0
    %963 = vmatpush1.bf16.msra.mxu0 %v904
    %964 = vmatprep.subr.bf16.mxu0 0
    %965 = vmatpush1.bf16.msra.mxu0 %v903
    %966 = vmatprep.subr.bf16.mxu0 0
    %967 = vmatpush1.bf16.msra.mxu0 %v902
    %968 = vmatprep.subr.bf16.mxu0 0
    %969 = vmatpush2.bf16.msra.mxu0 %v917
    %970 = vmatprep.subr.bf16.mxu0 0
    %971 = vmatpush2.bf16.msra.mxu0 %v916
    %972 = vmatprep.subr.bf16.mxu0 0
    %973 = vmatpush2.bf16.msra.mxu0 %v915
    %974 = vmatprep.subr.bf16.mxu0 0
    %975 = vmatpush2.bf16.msra.mxu0 %v914
    %976 = vmatprep.subr.bf16.mxu0 0
    %977 = vmatpush2.bf16.msra.mxu0 %v913
    %978 = vmatprep.subr.bf16.mxu0 0
    %979 = vmatpush2.bf16.msra.mxu0 %v912
    %980 = vmatprep.subr.bf16.mxu0 0
    %981 = vmatpush2.bf16.msra.mxu0 %v911
    %982 = vmatprep.subr.bf16.mxu0 0
    %983 = vmatpush2.bf16.msra.mxu0 %v910
    %984 = vmatprep.mubr.bf16.mxu0 %v159
    %985 = vmatmul.mubr.bf16.gmra.mxu0 %v152
    %v986 = vpop.f32.mrf.mxu0
    %v987 = vadd.f32 0.0, %v986
    %v988 = vpop.f32.mrf.mxu0
    %v989 = vpop.f32.mrf.mxu0
    %v990 = vpop.f32.mrf.mxu0
    %991 = vdwg.mxu0
    %992 = vmatprep.subr.bf16.mxu0 0
    %993 = vmatpush1.bf16.msra.mxu0 %v925
    %994 = vmatprep.subr.bf16.mxu0 0
    %995 = vmatpush1.bf16.msra.mxu0 %v924
    %996 = vmatprep.subr.bf16.mxu0 0
    %997 = vmatpush1.bf16.msra.mxu0 %v923
    %998 = vmatprep.subr.bf16.mxu0 0
    %999 = vmatpush1.bf16.msra.mxu0 %v922
    %1000 = vmatprep.subr.bf16.mxu0 0
    %1001 = vmatpush1.bf16.msra.mxu0 %v921
    %1002 = vmatprep.subr.bf16.mxu0 0
    %1003 = vmatpush1.bf16.msra.mxu0 %v920
    %1004 = vmatprep.subr.bf16.mxu0 0
    %1005 = vmatpush1.bf16.msra.mxu0 %v919
    %1006 = vmatprep.subr.bf16.mxu0 0
    %1007 = vmatpush1.bf16.msra.mxu0 %v918
    %1008 = vmatprep.subr.bf16.mxu0 0
    %1009 = vmatpush2.bf16.msra.mxu0 0
    %1010 = vmatprep.subr.bf16.mxu0 0
    %1011 = vmatpush2.bf16.msra.mxu0 0
    %1012 = vmatprep.subr.bf16.mxu0 0
    %1013 = vmatpush2.bf16.msra.mxu0 0
    %1014 = vmatprep.subr.bf16.mxu0 0
    %1015 = vmatpush2.bf16.msra.mxu0 0
    %1016 = vmatprep.subr.bf16.mxu0 0
    %1017 = vmatpush2.bf16.msra.mxu0 0
    %1018 = vmatprep.subr.bf16.mxu0 0
    %1019 = vmatpush2.bf16.msra.mxu0 0
    %1020 = vmatprep.subr.bf16.mxu0 0
    %1021 = vmatpush2.bf16.msra.mxu0 0
    %1022 = vmatprep.subr.bf16.mxu0 0
    %1023 = vmatpush2.bf16.msra.mxu0 %v926
    %1024 = vmatprep.mubr.bf16.mxu0 %v317
    %1025 = vmatmul.mubr.bf16.gmra.mxu0 %v160
    %v1026 = vpop.f32.mrf.mxu0
    %v1027 = vadd.f32 %v987, %v1026
    %v1028 = vpop.f32.mrf.mxu0
    %v1029 = vpop.f32.mrf.mxu0
    %v1030 = vpop.f32.mrf.mxu0
    %1031 = vdwg.mxu0
    %v1045 = vunpack.c.l.b16 %v764
    %v1046 = vunpack.c.l.b16 %v765
    %v1047 = vunpack.c.l.b16 %v766
    %v1048 = vunpack.c.l.b16 %v767
    %v1049 = vunpack.c.l.b16 %v768
    %v1050 = vunpack.c.l.b16 %v769
    %v1051 = vunpack.c.l.b16 %v770
    %v1052 = vunpack.c.l.b16 %v771
    %v1053 = vunpack.c.l.b16 %v772
    %v1054 = vunpack.c.l.b16 %v773
    %v1055 = vunpack.c.l.b16 %v774
    %v1056 = vunpack.c.l.b16 %v775
    %v1057 = vunpack.c.l.b16 %v776
    %v1058 = vpack.c.b16 %v1046, %v1045
    %v1059 = vpack.c.b16 %v1048, %v1047
    %v1060 = vpack.c.b16 %v1050, %v1049
    %v1061 = vpack.c.b16 %v1052, %v1051
    %v1062 = vpack.c.b16 %v1054, %v1053
    %v1063 = vpack.c.b16 %v1056, %v1055
    %v1064 = vpack.c.b16 %v1057, %v1057
    %v1072 = vsel %vm447, %v1064, 0
    %1074 = vmatprep.subr.bf16.mxu0 0
    %1075 = vmatpush1.bf16.msra.mxu0 0
    %1076 = vmatprep.subr.bf16.mxu0 0
    %1077 = vmatpush1.bf16.msra.mxu0 %v1072
    %1078 = vmatprep.subr.bf16.mxu0 0
    %1079 = vmatpush1.bf16.msra.mxu0 %v1063
    %1080 = vmatprep.subr.bf16.mxu0 0
    %1081 = vmatpush1.bf16.msra.mxu0 %v1062
    %1082 = vmatprep.subr.bf16.mxu0 0
    %1083 = vmatpush1.bf16.msra.mxu0 %v1061
    %1084 = vmatprep.subr.bf16.mxu0 0
    %1085 = vmatpush1.bf16.msra.mxu0 %v1060
    %1086 = vmatprep.subr.bf16.mxu0 0
    %1087 = vmatpush1.bf16.msra.mxu0 %v1059
    %1088 = vmatprep.subr.bf16.mxu0 0
    %1089 = vmatpush1.bf16.msra.mxu0 %v1058
    %1090 = vmatprep.subr.bf16.mxu0 0
    %1091 = vmatpush2.bf16.msra.mxu0 0
    %1092 = vmatprep.subr.bf16.mxu0 0
    %1093 = vmatpush2.bf16.msra.mxu0 0
    %1094 = vmatprep.subr.bf16.mxu0 0
    %1095 = vmatpush2.bf16.msra.mxu0 0
    %1096 = vmatprep.subr.bf16.mxu0 0
    %1097 = vmatpush2.bf16.msra.mxu0 0
    %1098 = vmatprep.subr.bf16.mxu0 0
    %1099 = vmatpush2.bf16.msra.mxu0 0
    %1100 = vmatprep.subr.bf16.mxu0 0
    %1101 = vmatpush2.bf16.msra.mxu0 0
    %1102 = vmatprep.subr.bf16.mxu0 0
    %1103 = vmatpush2.bf16.msra.mxu0 0
    %1104 = vmatprep.subr.bf16.mxu0 0
    %1105 = vmatpush2.bf16.msra.mxu0 0
    %1106 = vmatprep.mubr.bf16.mxu0 0
    %1107 = vmatmul.mubr.bf16.gmra.mxu0 %v445
    %v1108 = vpop.f32.mrf.mxu0
    %v1109 = vadd.f32 0.0, %v1108
    %v1110 = vpop.f32.mrf.mxu0
    %v1111 = vpop.f32.mrf.mxu0
    %v1112 = vadd.f32 0.0, %v1111
    %v1113 = vpop.f32.mrf.mxu0
    %1114 = vdwg.mxu0
    %v1117 = vunpack.c.l.s4 1966171168
    %v1118 = vunpack.c.0.s8 %v1117
    %v1119 = vlaneseq
    %v1120 = vshrl.u32 %v1119, 7
    %v1121 = vsub.s32 %v1118, %v1120
    %v1122 = vrot.slane %v1027, %v1121
    %v1123 = vcombine.high %v1122, %v1122
    %v1125 = vunpack.c.l.s4 1966171168
    %v1126 = vunpack.c.0.s8 %v1125
    %v1127 = vlaneseq
    %v1128 = vshrl.u32 %v1127, 7
    %v1129 = vsub.s32 %v1126, %v1128
    %v1130 = vrot.slane %v1122, %v1129
    %v1132 = vunpack.c.l.s4 1966171168
    %v1133 = vunpack.c.0.s8 %v1132
    %v1134 = vlaneseq
    %v1135 = vshrl.u32 %v1134, 7
    %v1136 = vsub.s32 %v1133, %v1135
    %v1137 = vrot.slane %v1123, %v1136
    %v1138 = vlaneseq
    %v1139 = vshrl.u32 %v1138, 7
    %v1140 = vsub.s32 0, %v1139
    %v1141 = vrot.slane %v1130, %v1140
    %v1142 = vlaneseq
    %v1143 = vshrl.u32 %v1142, 7
    %v1144 = vsub.s32 0, %v1143
    %v1145 = vrot.slane %v1137, %v1144
    %v1148 = vadd.f32 %v1109, %v1141
    %v1149 = vadd.f32 %v1112, %v1145
    %v1151 = vlaneseq
    %v1152 = vshrl.u32 %v1151, 7
    %v1153 = vsub.s32 0, %v1152
    %v1154 = vrot.slane %v778, %v1153
    %v1156 = vadd.f32 %v1148, %v1154
    %v1157 = vadd.f32 %v1149, %v1154
    %vm1158 = vcmp.gt.f32.partialorder %v1156, 0.0
    %vm1159 = vcmp.gt.f32.partialorder %v1157, 0.0
    %v1160 = vmin.f32 %v1156, 0.0
    %v1161 = vmin.f32 %v1157, 0.0
    %v1162 = vmul.f32 %v1160, 1.442695
    %v1163 = vpow.pop %v1162
    %v1164 = vmul.f32 %v1161, 1.442695
    %v1165 = vpow.pop %v1164
    %v1166 = vsub.f32 %v1163, 1.0
    %v1167 = vsub.f32 %v1165, 1.0
    %v1168 = vsel %vm1158, %v1156, %v1166
    %v1169 = vsel %vm1159, %v1157, %v1167
    %v1170 = vpack.c.bf16 %v1168, %v1168
    %v1171 = vpack.c.bf16 %v1169, %v1169
    %v1173 = vlaneseq
    %v1174 = vshrl.u32 %v1173, 7
    %v1175 = vsub.s32 0, %v1174
    %v1176 = vrot.slane %v797, %v1175
    %v1180 = vunpack.c.l.b16 %v1170
    %v1181 = vunpack.c.l.b16 %v1171
    %v1182 = vpack.c.b16 %v1181, %v1180
    %v1200 = vunpack.c.l.b16 %v780
    %v1201 = vunpack.c.l.b16 %v781
    %v1202 = vunpack.c.l.b16 %v782
    %v1203 = vunpack.c.l.b16 %v783
    %v1204 = vunpack.c.l.b16 %v784
    %v1205 = vunpack.c.l.b16 %v785
    %v1206 = vunpack.c.l.b16 %v786
    %v1207 = vunpack.c.l.b16 %v787
    %v1208 = vunpack.c.l.b16 %v788
    %v1209 = vunpack.c.l.b16 %v789
    %v1210 = vunpack.c.l.b16 %v790
    %v1211 = vunpack.c.l.b16 %v791
    %v1212 = vunpack.c.l.b16 %v792
    %v1213 = vunpack.c.l.b16 %v793
    %v1214 = vunpack.c.l.b16 %v794
    %v1215 = vunpack.c.l.b16 %v795
    %v1216 = vpack.c.b16 %v1201, %v1200
    %v1217 = vpack.c.b16 %v1203, %v1202
    %v1218 = vpack.c.b16 %v1205, %v1204
    %v1219 = vpack.c.b16 %v1207, %v1206
    %v1220 = vpack.c.b16 %v1209, %v1208
    %v1221 = vpack.c.b16 %v1211, %v1210
    %v1222 = vpack.c.b16 %v1213, %v1212
    %v1223 = vpack.c.b16 %v1215, %v1214
    %1232 = vmatprep.subr.bf16.mxu0 0
    %1233 = vmatpush1.bf16.msra.mxu0 %v1223
    %1234 = vmatprep.subr.bf16.mxu0 0
    %1235 = vmatpush1.bf16.msra.mxu0 %v1222
    %1236 = vmatprep.subr.bf16.mxu0 0
    %1237 = vmatpush1.bf16.msra.mxu0 %v1221
    %1238 = vmatprep.subr.bf16.mxu0 0
    %1239 = vmatpush1.bf16.msra.mxu0 %v1220
    %1240 = vmatprep.subr.bf16.mxu0 0
    %1241 = vmatpush1.bf16.msra.mxu0 %v1219
    %1242 = vmatprep.subr.bf16.mxu0 0
    %1243 = vmatpush1.bf16.msra.mxu0 %v1218
    %1244 = vmatprep.subr.bf16.mxu0 0
    %1245 = vmatpush1.bf16.msra.mxu0 %v1217
    %1246 = vmatprep.subr.bf16.mxu0 0
    %1247 = vmatpush1.bf16.msra.mxu0 %v1216
    %1248 = vmatprep.subr.bf16.mxu0 0
    %1249 = vmatpush2.bf16.msra.mxu0 0
    %1250 = vmatprep.subr.bf16.mxu0 0
    %1251 = vmatpush2.bf16.msra.mxu0 0
    %1252 = vmatprep.subr.bf16.mxu0 0
    %1253 = vmatpush2.bf16.msra.mxu0 0
    %1254 = vmatprep.subr.bf16.mxu0 0
    %1255 = vmatpush2.bf16.msra.mxu0 0
    %1256 = vmatprep.subr.bf16.mxu0 0
    %1257 = vmatpush2.bf16.msra.mxu0 0
    %1258 = vmatprep.subr.bf16.mxu0 0
    %1259 = vmatpush2.bf16.msra.mxu0 0
    %1260 = vmatprep.subr.bf16.mxu0 0
    %1261 = vmatpush2.bf16.msra.mxu0 0
    %1262 = vmatprep.subr.bf16.mxu0 0
    %1263 = vmatpush2.bf16.msra.mxu0 0
    %1264 = vmatprep.mubr.bf16.mxu0 0
    %1265 = vmatmul.mubr.bf16.gmra.mxu0 %v1182
    %v1266 = vpop.f32.mrf.mxu0
    %v1267 = vadd.f32 %v1176, %v1266
    %v1268 = vpop.f32.mrf.mxu0
    %v1269 = vpop.f32.mrf.mxu0
    %v1270 = vadd.f32 %v1176, %v1269
    %v1271 = vpop.f32.mrf.mxu0
    %1272 = vdwg.mxu0
    %vm1273 = vcmp.gt.f32.partialorder %v1267, 0.0
    %vm1274 = vcmp.gt.f32.partialorder %v1270, 0.0
    %v1275 = vmin.f32 %v1267, 0.0
    %v1276 = vmin.f32 %v1270, 0.0
    %v1277 = vmul.f32 %v1275, 1.442695
    %v1278 = vpow.pop %v1277
    %v1279 = vmul.f32 %v1276, 1.442695
    %v1280 = vpow.pop %v1279
    %v1281 = vsub.f32 %v1278, 1.0
    %v1282 = vsub.f32 %v1280, 1.0
    %v1283 = vsel %vm1273, %v1267, %v1281
    %v1284 = vsel %vm1274, %v1270, %v1282
    %v1286 = vlaneseq
    %v1287 = vshrl.u32 %v1286, 7
    %v1288 = vsub.s32 0, %v1287
    %v1289 = vrot.slane %v799, %v1288
    %v1291 = vmul.f32 %v1283, %v1289
    %v1292 = vmul.f32 %v1284, %v1289
    %1293 = vadd.xlane.f32.xlu0 %v1291
    %v1294 = vpop.xlane.xlu0 %1293
    %1295 = vadd.xlane.f32.xlu0 %v1292
    %v1296 = vpop.xlane.xlu0 %1295
    %v1298 = vlaneseq
    %v1299 = vshrl.u32 %v1298, 7
    %v1300 = vsub.s32 0, %v1299
    %v1301 = vrot.slane %v801, %v1300
    %1302 = vset.pattern.permute.xlu0 0
    %1303 = vperm.xlu0 %1302, %v1301
    %v1304 = vpop.permute.xlu0 %1303
    %v1306 = vadd.f32 %v1294, %v1304
    %v1307 = vadd.f32 %v1296, %v1304
    %v1308 = vsub.f32 0.0, %v1306
    %v1309 = vsub.f32 0.0, %v1307
    %v1310 = vmul.f32 %v1308, 1.442695
    %v1311 = vpow.pop %v1310
    %v1312 = vmul.f32 %v1309, 1.442695
    %v1313 = vpow.pop %v1312
    %v1314 = vadd.f32 %v1311, 1.0
    %v1315 = vadd.f32 %v1313, 1.0
    %v1316 = vrcp.pop %v1314
    %v1317 = vrcp.pop %v1315
    %v1320 = vlaneseq
    %v1321 = vshrl.u32 %v1320, 7
    %v1322 = vsub.s32 %v698, %v1321
    %v1323 = vrot.slane %v1316, %v1322
    %v1324 = vlaneseq
    %v1325 = vshrl.u32 %v1324, 7
    %v1326 = vsub.s32 %v698, %v1325
    %v1327 = vrot.slane %v1317, %v1326
    %v1328 = vsel %vm707, %v1327, %v1323
    %1330 = vst.msk [vmem:[#allocation6] sm:$0x3] %vm710, %v1328
    // Predicated region
    $region42: #{tpu_custom_call.1} parent=1 // pred_check
      _
    $region43: #{tpu_custom_call.1} parent=1 // pred_check_branch
      %1332 = sbr.rel (0) target = $region45
    $region44: #{tpu_custom_call.1} parent=1 // pred_region
      %s1334 = ssub.s32 32, 32
      %1335 = vsyncadd [#allocation4], %s1334
      %s1337 = sshll.u32 [#allocation5], 4
      %s1338 = int_to_ptr.vmem [resolvable:$true] %s1337
      %1340 = dma.vmem_to_hbm [thread:$0]  %s1338, 32, %s9, [#allocation4]
    $region45: #{tpu_custom_call.1} parent=1 // pred_fallthru
      _
    // Predicated region
    $region46: #{tpu_custom_call.1} parent=1 // pred_check
      _
    $region47: #{tpu_custom_call.1} parent=1 // pred_check_branch
      %1342 = sbr.rel (0) target = $region49
    $region48: #{tpu_custom_call.1} parent=1 // pred_region
      %s1344 = ssub.s32 32, 32
      %1345 = vsyncadd [#allocation7], %s1344
      %s1347 = sshll.u32 [#allocation6], 4
      %s1348 = int_to_ptr.vmem [resolvable:$true] %s1347
      %1350 = dma.vmem_to_hbm [thread:$0]  %s1348, 32, %s10, [#allocation7]
    $region49: #{tpu_custom_call.1} parent=1 // pred_fallthru
      _
    // Predicated region
    $region50: #{tpu_custom_call.1} parent=1 // pred_check
      _
    $region51: #{tpu_custom_call.1} parent=1 // pred_check_branch
      %1352 = sbr.rel (0) target = $region53
    $region52: #{tpu_custom_call.1} parent=1 // pred_region
      %1353 = dma.done [#allocation4], 32
    $region53: #{tpu_custom_call.1} parent=1 // pred_fallthru
      _
    // Predicated region
    $region54: #{tpu_custom_call.1} parent=1 // pred_check
      _
    $region55: #{tpu_custom_call.1} parent=1 // pred_check_branch
      %1355 = sbr.rel (0) target = $region57
    $region56: #{tpu_custom_call.1} parent=1 // pred_region
      %1356 = dma.done [#allocation7], 32
    $region57: #{tpu_custom_call.1} parent=1 // pred_fallthru
      _
    %1357 = vsyncpa [#allocation3], 1
    %1358 = vsyncpa [#allocation4], 1
    %1359 = vsyncpa [#allocation7], 1

</llo_original>
